<compile_context>
chip_gen: v7x
topology: tpu7x:2x2x1
jax: 0.10.0
libtpu: 0.0.40
codegen_flags: <defaults>
</compile_context>

<pallas_src>
import functools

import jax
import jax.numpy as jnp
from jax import lax
from jax.experimental import pallas as pl
from jax.experimental.pallas import tpu as pltpu

LANE = 128  # TPU lane width; all channel dims are zero-padded to this.


def _pad_axis(a, axis, size):
    pad = size - a.shape[axis]
    if pad <= 0:
        return a
    widths = [(0, 0)] * a.ndim
    widths[axis] = (0, pad)
    return jnp.pad(a, widths)


def _pick_btile(B, T, target_rows=256, max_rows=4096):
    """Largest batch tile (divisor of B) whose flattened row count obeys the
    (8,128) sublane rule and a VMEM budget, preferring >= target_rows rows so
    the MXU M dimension is full."""
    best = None
    for bt in range(1, B + 1):
        if B % bt or (bt * T) % 8:
            continue
        if best is not None and bt * T > max_rows:
            break
        best = bt
        if bt * T >= target_rows:
            break
    return best if best is not None else B


# ----------------------------------------------------------------------------
# Fused kernel: all temporal blocks + linear head for one batch tile.
# refs = (x_ref, <per-block weights...>, w_out, b_out, o_ref)
# x_ref / o_ref are (B_TILE*T, 128); row r corresponds to (b = r // T, t = r % T).
# ----------------------------------------------------------------------------
def _tcn_fused_kernel(*refs, ksize, dilations, has_down, seq_len):
    x_ref, o_ref = refs[0], refs[-1]
    wrefs = refs[1:-1]
    M = x_ref.shape[0]

    # Hoisted per-row time index (row mod T) for the causal masks.
    t_idx = lax.broadcasted_iota(jnp.int32, (M, 1), 0) % seq_len

    def shifted(h, shift):
        # result[b*T + t] = h[b*T + t - shift] if t >= shift else 0 (causal pad).
        # pltpu.roll wraps across batch boundaries, but those rows have
        # (t mod T) < shift and are zeroed by the mask, so the roll trick is safe
        # with batch flattened into the row axis.
        if shift == 0:
            return h
        rolled = pltpu.roll(h, shift, axis=0)          # XLU, co-issues w/ MXU
        return jnp.where(t_idx >= shift, rolled, 0.0)

    def causal_conv(h, w_ref, b_ref, dil):
        # Per-tap accumulating dots (no (M, K*128) concat buffer): MXU feed only.
        out = None
        for k in range(ksize):
            tap = shifted(h, (ksize - 1 - k) * dil).astype(jnp.bfloat16)
            d = jnp.dot(tap, w_ref[k], preferred_element_type=jnp.float32)
            out = d if out is None else out + d
        return out + b_ref[...]

    h = x_ref[...].astype(jnp.float32)                 # (M, 128) f32
    cur = 0
    for i, dil in enumerate(dilations):
        w1, b1, w2, b2 = wrefs[cur:cur + 4]
        cur += 4
        # conv1 -> chomp -> relu   (dropout is an eval-mode identity)
        a = jnp.maximum(causal_conv(h, w1, b1, dil), 0.0)
        # conv2 -> chomp -> relu
        a = jnp.maximum(causal_conv(a, w2, b2, dil), 0.0)
        if has_down[i]:
            # downsample 1x1 conv (only when cin != cout, as in TemporalBlock)
            wd, bd = wrefs[cur:cur + 2]
            cur += 2
            res = jnp.dot(h.astype(jnp.bfloat16), wd[...],
                          preferred_element_type=jnp.float32) + bd[...]
        else:
            res = h                                    # identity residual: no matmul
        h = jnp.maximum(a + res, 0.0)
    w_out, b_out = wrefs[cur], wrefs[cur + 1]
    o_ref[...] = (jnp.dot(h.astype(jnp.bfloat16), w_out[...],
                          preferred_element_type=jnp.float32)
                  + b_out[...]).astype(o_ref.dtype)


# ----------------------------------------------------------------------------
# Host-side wrappers
# ----------------------------------------------------------------------------
def init_params(key, input_size, classes, num_channels, kernel_size):
    """Deterministic synthetic params.  weight_norm is folded (plain weights).
    Conv weights stored as (K, Cin, Cout) = transpose of PyTorch (Cout, Cin, K).
    Blocks with cin == cout have NO downsample weights (identity residual)."""
    params = {"blocks": []}
    cin = input_size
    for cout in num_channels:
        key, k1, k2, k3, k4, k5, k6 = jax.random.split(key, 7)
        blk = {
            "w1": 0.1 * jax.random.normal(k1, (kernel_size, cin, cout), jnp.float32),
            "b1": 0.1 * jax.random.normal(k2, (1, cout), jnp.float32),
            "w2": 0.1 * jax.random.normal(k3, (kernel_size, cout, cout), jnp.float32),
            "b2": 0.1 * jax.random.normal(k4, (1, cout), jnp.float32),
        }
        if cin != cout:  # downsample 1x1 conv, as in TemporalBlock
            blk["wd"] = 0.1 * jax.random.normal(k5, (cin, cout), jnp.float32)
            blk["bd"] = 0.1 * jax.random.normal(k6, (1, cout), jnp.float32)
        params["blocks"].append(blk)
        cin = cout
    key, k1, k2 = jax.random.split(key, 3)
    params["w_out"] = 0.1 * jax.random.normal(k1, (cin, classes), jnp.float32)
    params["b_out"] = 0.1 * jax.random.normal(k2, (1, classes), jnp.float32)
    return params


def pack_params(params, kernel_size):
    """Zero-pad channel dims to LANE.  Matmul weights are stored bf16 (native MXU
    input on v5e/v6e/v7x, halves resident-weight VMEM); biases stay f32.
    Conv weights keep their (K, LANE, LANE) tap structure (per-tap dots in-kernel).
    Returns (packed_list, has_down) where has_down is a static per-block flag."""
    packed, has_down = [], []
    dims = [params["w_out"].shape[0], params["w_out"].shape[1]]
    for blk in params["blocks"]:
        dims += [blk["w1"].shape[1], blk["w1"].shape[2], blk["w2"].shape[2]]
    assert max(dims) <= LANE, (
        "pack_params assumes every channel count (C_in, num_channels, classes) "
        "is <= 128; got %s" % (dims,))
    for blk in params["blocks"]:
        packed.append(_pad_axis(_pad_axis(blk["w1"], 1, LANE), 2, LANE)
                      .astype(jnp.bfloat16))
        packed.append(_pad_axis(blk["b1"], 1, LANE).astype(jnp.float32))
        packed.append(_pad_axis(_pad_axis(blk["w2"], 1, LANE), 2, LANE)
                      .astype(jnp.bfloat16))
        packed.append(_pad_axis(blk["b2"], 1, LANE).astype(jnp.float32))
        down = "wd" in blk
        has_down.append(down)
        if down:
            packed.append(_pad_axis(_pad_axis(blk["wd"], 0, LANE), 1, LANE)
                          .astype(jnp.bfloat16))
            packed.append(_pad_axis(blk["bd"], 1, LANE).astype(jnp.float32))
    packed.append(_pad_axis(_pad_axis(params["w_out"], 0, LANE), 1, LANE)
                  .astype(jnp.bfloat16))
    packed.append(_pad_axis(params["b_out"], 1, LANE).astype(jnp.float32))
    return packed, tuple(has_down)


def tcn_forward(x_tbc, packed, has_down, *, num_blocks, classes, kernel_size,
                dilation):
    # PyTorch: self.tcn(x.permute(1, 2, 0)).permute(0, 2, 1) then self.out(.)
    T, B, C_in = x_tbc.shape
    assert C_in <= LANE
    # (T, B, C) -> (B, T, C) -> (B*T, C); pad channels to a dense 128-lane layout.
    # TODO(synk): at production B*T, pass x with its true last dim (pad into VMEM
    # in-kernel) and emit bf16 outputs to cut the padded-lane HBM traffic.
    x = _pad_axis(jnp.transpose(x_tbc, (1, 0, 2)).reshape(B * T, C_in), 1, LANE)
    dilations = tuple(dilation ** i for i in range(num_blocks))

    b_tile = _pick_btile(B, T)                 # flatten batch into the M dim
    rows = b_tile * T
    kern = functools.partial(_tcn_fused_kernel, ksize=kernel_size,
                             dilations=dilations, has_down=has_down, seq_len=T)

    in_specs = [pl.BlockSpec((rows, LANE), lambda b: (b, 0))]
    for w in packed:  # whole-array resident weight blocks (constant index maps)
        # TODO(synk): on v7x (64 MiB VMEM), single-buffer these constant blocks
        # (pipeline_mode=pl.Buffered(1)) and pack W1|Wd / head pairs to N=256
        # columns to fill the 2x256 MXU; left out here for maximum portability.
        in_specs.append(
            pl.BlockSpec(w.shape, lambda b, _n=w.ndim: (0,) * _n))

    # Explicit scoped-VMEM budget (v5e defaults to 16 MiB): double-buffered
    # weights + a few activation-sized buffers + slack, clamped for v7x.
    weight_bytes = sum(int(w.size) * w.dtype.itemsize for w in packed)
    act_bytes = rows * LANE * 4
    vmem_limit = int(min(56 << 20,
                         max(16 << 20, 2 * weight_bytes + 8 * act_bytes + (2 << 20))))

    out = pl.pallas_call(
        kern,
        out_shape=jax.ShapeDtypeStruct((B * T, LANE), jnp.float32),
        grid=(B // b_tile,),
        in_specs=in_specs,
        out_specs=pl.BlockSpec((rows, LANE), lambda b: (b, 0)),
        compiler_params=pltpu.CompilerParams(
            dimension_semantics=("parallel",),
            vmem_limit_bytes=vmem_limit),
    )(x, *packed)
    # Drop lane padding -> (B, T, classes), matching Linear(num_channels[-1], classes).
    return out[:, :classes].reshape(B, T, classes)


def _ref_forward(x_tbc, params, *, kernel_size, dilation):
    """Pure-JAX reference of the same forward, mirroring the kernel's bf16
    matmul operands / f32 accumulation, for the correctness check."""
    def mm(a, w):
        return jnp.einsum("btc,cd->btd", a.astype(jnp.bfloat16),
                          w.astype(jnp.bfloat16),
                          preferred_element_type=jnp.float32)

    def conv(x, w, b, d):
        T = x.shape[1]
        out = jnp.zeros((x.shape[0], T, w.shape[2]), jnp.float32)
        for k in range(kernel_size):
            shift = (kernel_size - 1 - k) * d
            xs = jnp.pad(x, ((0, 0), (shift, 0), (0, 0)))[:, :T, :]
            out = out + mm(xs, w[k])
        return out + b

    h = jnp.transpose(x_tbc, (1, 0, 2)).astype(jnp.float32)
    for i, blk in enumerate(params["blocks"]):
        d = dilation ** i
        a = jax.nn.relu(conv(h, blk["w1"], blk["b1"], d))
        a = jax.nn.relu(conv(a, blk["w2"], blk["b2"], d))
        if "wd" in blk:
            res = mm(h, blk["wd"]) + blk["bd"]
        else:
            res = h
        h = jax.nn.relu(a + res)
    return mm(h, params["w_out"]) + params["b_out"]


if __name__ == "__main__":
    # Small deterministic config: x is (seq=T, batch=B, features=C_in),
    # matching the module's expected (T, B, C) input before permute(1, 2, 0).
    T, B, C_in = 16, 2, 4
    classes = 3
    num_channels = [8, 8]
    kernel_size = 2
    dilation = 2
    dropout = 0.0  # eval-mode identity

    key = jax.random.PRNGKey(0)
    key, kx = jax.random.split(key)
    x = jax.random.normal(kx, (T, B, C_in), jnp.float32)
    params = init_params(key, C_in, classes, num_channels, kernel_size)
    packed, has_down = pack_params(params, kernel_size)

    out = tcn_forward(x, packed, has_down, num_blocks=len(num_channels),
                      classes=classes, kernel_size=kernel_size,
                      dilation=dilation)
    out = jax.block_until_ready(out)

    ref = _ref_forward(x, params, kernel_size=kernel_size, dilation=dilation)
    assert out.shape == (B, T, classes), out.shape
    err = float(jnp.max(jnp.abs(out - ref)))
    assert err < 1e-2, err  # bf16-matmul tolerance (ref mirrors the casts)
    print("KERNEL_OK")
</pallas_src>

<mosaic_0001>
module attributes {stable_mosaic.version = 11 : i64} {
  func.func @_tcn_fused_kernel(%arg0: i32, %arg1: memref<32x128xf32, #tpu.memory_space<vmem>>, %arg2: memref<2x128x128xbf16, #tpu.memory_space<vmem>>, %arg3: memref<1x128xf32, #tpu.memory_space<vmem>>, %arg4: memref<2x128x128xbf16, #tpu.memory_space<vmem>>, %arg5: memref<1x128xf32, #tpu.memory_space<vmem>>, %arg6: memref<128x128xbf16, #tpu.memory_space<vmem>>, %arg7: memref<1x128xf32, #tpu.memory_space<vmem>>, %arg8: memref<2x128x128xbf16, #tpu.memory_space<vmem>>, %arg9: memref<1x128xf32, #tpu.memory_space<vmem>>, %arg10: memref<2x128x128xbf16, #tpu.memory_space<vmem>>, %arg11: memref<1x128xf32, #tpu.memory_space<vmem>>, %arg12: memref<128x128xbf16, #tpu.memory_space<vmem>>, %arg13: memref<1x128xf32, #tpu.memory_space<vmem>>, %arg14: memref<32x128xf32, #tpu.memory_space<vmem>>) attributes {dimension_semantics = [#tpu.dimension_semantics<parallel>], iteration_bounds = array<i64: 1>, scalar_prefetch = 0 : i64, scratch_operands = 0 : i64, tpu.core_type = #tpu.core_type<tc>, window_params = [{transform_indices = @transform_0, window_bounds = array<i64: 32, 128>}, {pipeline_mode = #tpu.pipeline_mode<synchronous>, transform_indices = @transform_1, window_bounds = array<i64: 2, 128, 128>}, {pipeline_mode = #tpu.pipeline_mode<synchronous>, transform_indices = @transform_2, window_bounds = array<i64: 1, 128>}, {pipeline_mode = #tpu.pipeline_mode<synchronous>, transform_indices = @transform_3, window_bounds = array<i64: 2, 128, 128>}, {pipeline_mode = #tpu.pipeline_mode<synchronous>, transform_indices = @transform_4, window_bounds = array<i64: 1, 128>}, {pipeline_mode = #tpu.pipeline_mode<synchronous>, transform_indices = @transform_5, window_bounds = array<i64: 128, 128>}, {pipeline_mode = #tpu.pipeline_mode<synchronous>, transform_indices = @transform_6, window_bounds = array<i64: 1, 128>}, {pipeline_mode = #tpu.pipeline_mode<synchronous>, transform_indices = @transform_7, window_bounds = array<i64: 2, 128, 128>}, {pipeline_mode = #tpu.pipeline_mode<synchronous>, transform_indices = @transform_8, window_bounds = array<i64: 1, 128>}, {pipeline_mode = #tpu.pipeline_mode<synchronous>, transform_indices = @transform_9, window_bounds = array<i64: 2, 128, 128>}, {pipeline_mode = #tpu.pipeline_mode<synchronous>, transform_indices = @transform_10, window_bounds = array<i64: 1, 128>}, {pipeline_mode = #tpu.pipeline_mode<synchronous>, transform_indices = @transform_11, window_bounds = array<i64: 128, 128>}, {pipeline_mode = #tpu.pipeline_mode<synchronous>, transform_indices = @transform_12, window_bounds = array<i64: 1, 128>}, {transform_indices = @transform_13, window_bounds = array<i64: 32, 128>}]} {
    %0 = tpu.iota {dimensions = array<i32: 0>} : vector<32x1xi32>
    %c16_i32 = arith.constant 16 : i32
    %c0_i32 = arith.constant 0 : i32
    %1 = arith.cmpi eq, %c16_i32, %c0_i32 : i32
    %c1_i32 = arith.constant 1 : i32
    %2 = arith.select %1, %c1_i32, %c16_i32 : i32
    %3 = vector.broadcast %2 : i32 to vector<32x1xi32>
    %4 = arith.remsi %0, %3 : vector<32x1xi32>
    %c0_i32_0 = arith.constant 0 : i32
    %5 = vector.broadcast %c0_i32_0 : i32 to vector<32x1xi32>
    %6 = arith.cmpi ne, %4, %5 : vector<32x1xi32>
    %c0_i32_1 = arith.constant 0 : i32
    %7 = vector.broadcast %c0_i32_1 : i32 to vector<32x1xi32>
    %8 = arith.cmpi slt, %4, %7 : vector<32x1xi32>
    %c0_i32_2 = arith.constant 0 : i32
    %9 = arith.cmpi slt, %2, %c0_i32_2 : i32
    %10 = vector.broadcast %9 : i1 to vector<32x1xi1>
    %11 = vector.broadcast %10 : vector<32x1xi1> to vector<32x1xi1>
    %12 = arith.xori %8, %11 : vector<32x1xi1>
    %13 = arith.andi %12, %6 : vector<32x1xi1>
    %14 = vector.broadcast %2 : i32 to vector<32x1xi32>
    %15 = arith.addi %4, %14 : vector<32x1xi32>
    %16 = arith.select %13, %15, %4 : vector<32x1xi1>, vector<32x1xi32>
    %c0 = arith.constant 0 : index
    %c0_3 = arith.constant 0 : index
    %17 = vector.load %arg1[%c0, %c0_3] : memref<32x128xf32, #tpu.memory_space<vmem>>, vector<32x128xf32>
    %c1_i32_4 = arith.constant 1 : i32
    %18 = tpu.dynamic_rotate %17 by %c1_i32_4 dim 0 : vector<32x128xf32>, i32 -> vector<32x128xf32>
    %c1_i32_5 = arith.constant 1 : i32
    %19 = vector.broadcast %c1_i32_5 : i32 to vector<32x1xi32>
    %20 = arith.cmpi sge, %16, %19 : vector<32x1xi32>
    %cst = arith.constant 0.000000e+00 : f32
    %21 = vector.shape_cast %20 : vector<32x1xi1> to vector<32x1xi1>
    %22 = vector.broadcast %21 : vector<32x1xi1> to vector<32x128xi1>
    %23 = vector.broadcast %cst : f32 to vector<32x128xf32>
    %24 = arith.select %22, %18, %23 : vector<32x128xi1>, vector<32x128xf32>
    %25 = arith.truncf %24 : vector<32x128xf32> to vector<32x128xbf16>
    %c0_6 = arith.constant 0 : index
    %c0_7 = arith.constant 0 : index
    %c0_8 = arith.constant 0 : index
    %26 = vector.load %arg2[%c0_6, %c0_7, %c0_8] : memref<2x128x128xbf16, #tpu.memory_space<vmem>>, vector<1x128x128xbf16>
    %27 = vector.shape_cast %26 : vector<1x128x128xbf16> to vector<128x128xbf16>
    %cst_9 = arith.constant dense<0.000000e+00> : vector<32x128xf32>
    %28 = tpu.matmul %25, %27, %cst_9 {dimension_numbers = #tpu.dot_dimension_numbers<[1], [0], [0], [1], [0, 0, 1, 1], [], []>} : vector<32x128xbf16>, vector<128x128xbf16>, vector<32x128xf32> -> vector<32x128xf32>
    %29 = arith.truncf %17 : vector<32x128xf32> to vector<32x128xbf16>
    %c1 = arith.constant 1 : index
    %c0_10 = arith.constant 0 : index
    %c0_11 = arith.constant 0 : index
    %30 = vector.load %arg2[%c1, %c0_10, %c0_11] : memref<2x128x128xbf16, #tpu.memory_space<vmem>>, vector<1x128x128xbf16>
    %31 = vector.shape_cast %30 : vector<1x128x128xbf16> to vector<128x128xbf16>
    %cst_12 = arith.constant dense<0.000000e+00> : vector<32x128xf32>
    %32 = tpu.matmul %29, %31, %cst_12 {dimension_numbers = #tpu.dot_dimension_numbers<[1], [0], [0], [1], [0, 0, 1, 1], [], []>} : vector<32x128xbf16>, vector<128x128xbf16>, vector<32x128xf32> -> vector<32x128xf32>
    %33 = arith.addf %28, %32 : vector<32x128xf32>
    %c0_13 = arith.constant 0 : index
    %c0_14 = arith.constant 0 : index
    %34 = vector.load %arg3[%c0_13, %c0_14] : memref<1x128xf32, #tpu.memory_space<vmem>>, vector<1x128xf32>
    %35 = vector.broadcast %34 : vector<1x128xf32> to vector<32x128xf32>
    %36 = arith.addf %33, %35 : vector<32x128xf32>
    %cst_15 = arith.constant 0.000000e+00 : f32
    %37 = vector.broadcast %cst_15 : f32 to vector<32x128xf32>
    %38 = arith.maximumf %36, %37 : vector<32x128xf32>
    %c1_i32_16 = arith.constant 1 : i32
    %39 = tpu.dynamic_rotate %38 by %c1_i32_16 dim 0 : vector<32x128xf32>, i32 -> vector<32x128xf32>
    %c1_i32_17 = arith.constant 1 : i32
    %40 = vector.broadcast %c1_i32_17 : i32 to vector<32x1xi32>
    %41 = arith.cmpi sge, %16, %40 : vector<32x1xi32>
    %cst_18 = arith.constant 0.000000e+00 : f32
    %42 = vector.shape_cast %41 : vector<32x1xi1> to vector<32x1xi1>
    %43 = vector.broadcast %42 : vector<32x1xi1> to vector<32x128xi1>
    %44 = vector.broadcast %cst_18 : f32 to vector<32x128xf32>
    %45 = arith.select %43, %39, %44 : vector<32x128xi1>, vector<32x128xf32>
    %46 = arith.truncf %45 : vector<32x128xf32> to vector<32x128xbf16>
    %c0_19 = arith.constant 0 : index
    %c0_20 = arith.constant 0 : index
    %c0_21 = arith.constant 0 : index
    %47 = vector.load %arg4[%c0_19, %c0_20, %c0_21] : memref<2x128x128xbf16, #tpu.memory_space<vmem>>, vector<1x128x128xbf16>
    %48 = vector.shape_cast %47 : vector<1x128x128xbf16> to vector<128x128xbf16>
    %cst_22 = arith.constant dense<0.000000e+00> : vector<32x128xf32>
    %49 = tpu.matmul %46, %48, %cst_22 {dimension_numbers = #tpu.dot_dimension_numbers<[1], [0], [0], [1], [0, 0, 1, 1], [], []>} : vector<32x128xbf16>, vector<128x128xbf16>, vector<32x128xf32> -> vector<32x128xf32>
    %50 = arith.truncf %38 : vector<32x128xf32> to vector<32x128xbf16>
    %c1_23 = arith.constant 1 : index
    %c0_24 = arith.constant 0 : index
    %c0_25 = arith.constant 0 : index
    %51 = vector.load %arg4[%c1_23, %c0_24, %c0_25] : memref<2x128x128xbf16, #tpu.memory_space<vmem>>, vector<1x128x128xbf16>
    %52 = vector.shape_cast %51 : vector<1x128x128xbf16> to vector<128x128xbf16>
    %cst_26 = arith.constant dense<0.000000e+00> : vector<32x128xf32>
    %53 = tpu.matmul %50, %52, %cst_26 {dimension_numbers = #tpu.dot_dimension_numbers<[1], [0], [0], [1], [0, 0, 1, 1], [], []>} : vector<32x128xbf16>, vector<128x128xbf16>, vector<32x128xf32> -> vector<32x128xf32>
    %54 = arith.addf %49, %53 : vector<32x128xf32>
    %c0_27 = arith.constant 0 : index
    %c0_28 = arith.constant 0 : index
    %55 = vector.load %arg5[%c0_27, %c0_28] : memref<1x128xf32, #tpu.memory_space<vmem>>, vector<1x128xf32>
    %56 = vector.broadcast %55 : vector<1x128xf32> to vector<32x128xf32>
    %57 = arith.addf %54, %56 : vector<32x128xf32>
    %cst_29 = arith.constant 0.000000e+00 : f32
    %58 = vector.broadcast %cst_29 : f32 to vector<32x128xf32>
    %59 = arith.maximumf %57, %58 : vector<32x128xf32>
    %60 = arith.truncf %17 : vector<32x128xf32> to vector<32x128xbf16>
    %c0_30 = arith.constant 0 : index
    %c0_31 = arith.constant 0 : index
    %61 = vector.load %arg6[%c0_30, %c0_31] : memref<128x128xbf16, #tpu.memory_space<vmem>>, vector<128x128xbf16>
    %cst_32 = arith.constant dense<0.000000e+00> : vector<32x128xf32>
    %62 = tpu.matmul %60, %61, %cst_32 {dimension_numbers = #tpu.dot_dimension_numbers<[1], [0], [0], [1], [0, 0, 1, 1], [], []>} : vector<32x128xbf16>, vector<128x128xbf16>, vector<32x128xf32> -> vector<32x128xf32>
    %c0_33 = arith.constant 0 : index
    %c0_34 = arith.constant 0 : index
    %63 = vector.load %arg7[%c0_33, %c0_34] : memref<1x128xf32, #tpu.memory_space<vmem>>, vector<1x128xf32>
    %64 = vector.broadcast %63 : vector<1x128xf32> to vector<32x128xf32>
    %65 = arith.addf %62, %64 : vector<32x128xf32>
    %66 = arith.addf %59, %65 : vector<32x128xf32>
    %cst_35 = arith.constant 0.000000e+00 : f32
    %67 = vector.broadcast %cst_35 : f32 to vector<32x128xf32>
    %68 = arith.maximumf %66, %67 : vector<32x128xf32>
    %c2_i32 = arith.constant 2 : i32
    %69 = tpu.dynamic_rotate %68 by %c2_i32 dim 0 : vector<32x128xf32>, i32 -> vector<32x128xf32>
    %c2_i32_36 = arith.constant 2 : i32
    %70 = vector.broadcast %c2_i32_36 : i32 to vector<32x1xi32>
    %71 = arith.cmpi sge, %16, %70 : vector<32x1xi32>
    %cst_37 = arith.constant 0.000000e+00 : f32
    %72 = vector.shape_cast %71 : vector<32x1xi1> to vector<32x1xi1>
    %73 = vector.broadcast %72 : vector<32x1xi1> to vector<32x128xi1>
    %74 = vector.broadcast %cst_37 : f32 to vector<32x128xf32>
    %75 = arith.select %73, %69, %74 : vector<32x128xi1>, vector<32x128xf32>
    %76 = arith.truncf %75 : vector<32x128xf32> to vector<32x128xbf16>
    %c0_38 = arith.constant 0 : index
    %c0_39 = arith.constant 0 : index
    %c0_40 = arith.constant 0 : index
    %77 = vector.load %arg8[%c0_38, %c0_39, %c0_40] : memref<2x128x128xbf16, #tpu.memory_space<vmem>>, vector<1x128x128xbf16>
    %78 = vector.shape_cast %77 : vector<1x128x128xbf16> to vector<128x128xbf16>
    %cst_41 = arith.constant dense<0.000000e+00> : vector<32x128xf32>
    %79 = tpu.matmul %76, %78, %cst_41 {dimension_numbers = #tpu.dot_dimension_numbers<[1], [0], [0], [1], [0, 0, 1, 1], [], []>} : vector<32x128xbf16>, vector<128x128xbf16>, vector<32x128xf32> -> vector<32x128xf32>
    %80 = arith.truncf %68 : vector<32x128xf32> to vector<32x128xbf16>
    %c1_42 = arith.constant 1 : index
    %c0_43 = arith.constant 0 : index
    %c0_44 = arith.constant 0 : index
    %81 = vector.load %arg8[%c1_42, %c0_43, %c0_44] : memref<2x128x128xbf16, #tpu.memory_space<vmem>>, vector<1x128x128xbf16>
    %82 = vector.shape_cast %81 : vector<1x128x128xbf16> to vector<128x128xbf16>
    %cst_45 = arith.constant dense<0.000000e+00> : vector<32x128xf32>
    %83 = tpu.matmul %80, %82, %cst_45 {dimension_numbers = #tpu.dot_dimension_numbers<[1], [0], [0], [1], [0, 0, 1, 1], [], []>} : vector<32x128xbf16>, vector<128x128xbf16>, vector<32x128xf32> -> vector<32x128xf32>
    %84 = arith.addf %79, %83 : vector<32x128xf32>
    %c0_46 = arith.constant 0 : index
    %c0_47 = arith.constant 0 : index
    %85 = vector.load %arg9[%c0_46, %c0_47] : memref<1x128xf32, #tpu.memory_space<vmem>>, vector<1x128xf32>
    %86 = vector.broadcast %85 : vector<1x128xf32> to vector<32x128xf32>
    %87 = arith.addf %84, %86 : vector<32x128xf32>
    %cst_48 = arith.constant 0.000000e+00 : f32
    %88 = vector.broadcast %cst_48 : f32 to vector<32x128xf32>
    %89 = arith.maximumf %87, %88 : vector<32x128xf32>
    %c2_i32_49 = arith.constant 2 : i32
    %90 = tpu.dynamic_rotate %89 by %c2_i32_49 dim 0 : vector<32x128xf32>, i32 -> vector<32x128xf32>
    %c2_i32_50 = arith.constant 2 : i32
    %91 = vector.broadcast %c2_i32_50 : i32 to vector<32x1xi32>
    %92 = arith.cmpi sge, %16, %91 : vector<32x1xi32>
    %cst_51 = arith.constant 0.000000e+00 : f32
    %93 = vector.shape_cast %92 : vector<32x1xi1> to vector<32x1xi1>
    %94 = vector.broadcast %93 : vector<32x1xi1> to vector<32x128xi1>
    %95 = vector.broadcast %cst_51 : f32 to vector<32x128xf32>
    %96 = arith.select %94, %90, %95 : vector<32x128xi1>, vector<32x128xf32>
    %97 = arith.truncf %96 : vector<32x128xf32> to vector<32x128xbf16>
    %c0_52 = arith.constant 0 : index
    %c0_53 = arith.constant 0 : index
    %c0_54 = arith.constant 0 : index
    %98 = vector.load %arg10[%c0_52, %c0_53, %c0_54] : memref<2x128x128xbf16, #tpu.memory_space<vmem>>, vector<1x128x128xbf16>
    %99 = vector.shape_cast %98 : vector<1x128x128xbf16> to vector<128x128xbf16>
    %cst_55 = arith.constant dense<0.000000e+00> : vector<32x128xf32>
    %100 = tpu.matmul %97, %99, %cst_55 {dimension_numbers = #tpu.dot_dimension_numbers<[1], [0], [0], [1], [0, 0, 1, 1], [], []>} : vector<32x128xbf16>, vector<128x128xbf16>, vector<32x128xf32> -> vector<32x128xf32>
    %101 = arith.truncf %89 : vector<32x128xf32> to vector<32x128xbf16>
    %c1_56 = arith.constant 1 : index
    %c0_57 = arith.constant 0 : index
    %c0_58 = arith.constant 0 : index
    %102 = vector.load %arg10[%c1_56, %c0_57, %c0_58] : memref<2x128x128xbf16, #tpu.memory_space<vmem>>, vector<1x128x128xbf16>
    %103 = vector.shape_cast %102 : vector<1x128x128xbf16> to vector<128x128xbf16>
    %cst_59 = arith.constant dense<0.000000e+00> : vector<32x128xf32>
    %104 = tpu.matmul %101, %103, %cst_59 {dimension_numbers = #tpu.dot_dimension_numbers<[1], [0], [0], [1], [0, 0, 1, 1], [], []>} : vector<32x128xbf16>, vector<128x128xbf16>, vector<32x128xf32> -> vector<32x128xf32>
    %105 = arith.addf %100, %104 : vector<32x128xf32>
    %c0_60 = arith.constant 0 : index
    %c0_61 = arith.constant 0 : index
    %106 = vector.load %arg11[%c0_60, %c0_61] : memref<1x128xf32, #tpu.memory_space<vmem>>, vector<1x128xf32>
    %107 = vector.broadcast %106 : vector<1x128xf32> to vector<32x128xf32>
    %108 = arith.addf %105, %107 : vector<32x128xf32>
    %cst_62 = arith.constant 0.000000e+00 : f32
    %109 = vector.broadcast %cst_62 : f32 to vector<32x128xf32>
    %110 = arith.maximumf %108, %109 : vector<32x128xf32>
    %111 = arith.addf %110, %68 : vector<32x128xf32>
    %cst_63 = arith.constant 0.000000e+00 : f32
    %112 = vector.broadcast %cst_63 : f32 to vector<32x128xf32>
    %113 = arith.maximumf %111, %112 : vector<32x128xf32>
    %114 = arith.truncf %113 : vector<32x128xf32> to vector<32x128xbf16>
    %c0_64 = arith.constant 0 : index
    %c0_65 = arith.constant 0 : index
    %115 = vector.load %arg12[%c0_64, %c0_65] : memref<128x128xbf16, #tpu.memory_space<vmem>>, vector<128x128xbf16>
    %cst_66 = arith.constant dense<0.000000e+00> : vector<32x128xf32>
    %116 = tpu.matmul %114, %115, %cst_66 {dimension_numbers = #tpu.dot_dimension_numbers<[1], [0], [0], [1], [0, 0, 1, 1], [], []>} : vector<32x128xbf16>, vector<128x128xbf16>, vector<32x128xf32> -> vector<32x128xf32>
    %c0_67 = arith.constant 0 : index
    %c0_68 = arith.constant 0 : index
    %117 = vector.load %arg13[%c0_67, %c0_68] : memref<1x128xf32, #tpu.memory_space<vmem>>, vector<1x128xf32>
    %118 = vector.broadcast %117 : vector<1x128xf32> to vector<32x128xf32>
    %119 = arith.addf %116, %118 : vector<32x128xf32>
    %c0_69 = arith.constant 0 : index
    %c0_70 = arith.constant 0 : index
    %120 = vector.load %arg14[%c0_69, %c0_70] : memref<32x128xf32, #tpu.memory_space<vmem>>, vector<32x128xf32>
    tpu.vector_store %arg14[%c0_69, %c0_70], %119 {strides = array<i32>} : memref<32x128xf32, #tpu.memory_space<vmem>>, vector<32x128xf32>,
    return
  }
  func.func @transform_0(%arg0: i32) -> (i32, i32) {
    %c0_i32 = arith.constant 0 : i32
    %c0_i32_0 = arith.constant 0 : i32
    return %arg0, %c0_i32 : i32, i32
  }
  func.func @transform_1(%arg0: i32) -> (i32, i32, i32) {
    %c0_i32 = arith.constant 0 : i32
    %c0_i32_0 = arith.constant 0 : i32
    %c0_i32_1 = arith.constant 0 : i32
    %c0_i32_2 = arith.constant 0 : i32
    return %c0_i32, %c0_i32_0, %c0_i32_1 : i32, i32, i32
  }
  func.func @transform_2(%arg0: i32) -> (i32, i32) {
    %c0_i32 = arith.constant 0 : i32
    %c0_i32_0 = arith.constant 0 : i32
    %c0_i32_1 = arith.constant 0 : i32
    return %c0_i32, %c0_i32_0 : i32, i32
  }
  func.func @transform_3(%arg0: i32) -> (i32, i32, i32) {
    %c0_i32 = arith.constant 0 : i32
    %c0_i32_0 = arith.constant 0 : i32
    %c0_i32_1 = arith.constant 0 : i32
    %c0_i32_2 = arith.constant 0 : i32
    return %c0_i32, %c0_i32_0, %c0_i32_1 : i32, i32, i32
  }
  func.func @transform_4(%arg0: i32) -> (i32, i32) {
    %c0_i32 = arith.constant 0 : i32
    %c0_i32_0 = arith.constant 0 : i32
    %c0_i32_1 = arith.constant 0 : i32
    return %c0_i32, %c0_i32_0 : i32, i32
  }
  func.func @transform_5(%arg0: i32) -> (i32, i32) {
    %c0_i32 = arith.constant 0 : i32
    %c0_i32_0 = arith.constant 0 : i32
    %c0_i32_1 = arith.constant 0 : i32
    return %c0_i32, %c0_i32_0 : i32, i32
  }
  func.func @transform_6(%arg0: i32) -> (i32, i32) {
    %c0_i32 = arith.constant 0 : i32
    %c0_i32_0 = arith.constant 0 : i32
    %c0_i32_1 = arith.constant 0 : i32
    return %c0_i32, %c0_i32_0 : i32, i32
  }
  func.func @transform_7(%arg0: i32) -> (i32, i32, i32) {
    %c0_i32 = arith.constant 0 : i32
    %c0_i32_0 = arith.constant 0 : i32
    %c0_i32_1 = arith.constant 0 : i32
    %c0_i32_2 = arith.constant 0 : i32
    return %c0_i32, %c0_i32_0, %c0_i32_1 : i32, i32, i32
  }
  func.func @transform_8(%arg0: i32) -> (i32, i32) {
    %c0_i32 = arith.constant 0 : i32
    %c0_i32_0 = arith.constant 0 : i32
    %c0_i32_1 = arith.constant 0 : i32
    return %c0_i32, %c0_i32_0 : i32, i32
  }
  func.func @transform_9(%arg0: i32) -> (i32, i32, i32) {
    %c0_i32 = arith.constant 0 : i32
    %c0_i32_0 = arith.constant 0 : i32
    %c0_i32_1 = arith.constant 0 : i32
    %c0_i32_2 = arith.constant 0 : i32
    return %c0_i32, %c0_i32_0, %c0_i32_1 : i32, i32, i32
  }
  func.func @transform_10(%arg0: i32) -> (i32, i32) {
    %c0_i32 = arith.constant 0 : i32
    %c0_i32_0 = arith.constant 0 : i32
    %c0_i32_1 = arith.constant 0 : i32
    return %c0_i32, %c0_i32_0 : i32, i32
  }
  func.func @transform_11(%arg0: i32) -> (i32, i32) {
    %c0_i32 = arith.constant 0 : i32
    %c0_i32_0 = arith.constant 0 : i32
    %c0_i32_1 = arith.constant 0 : i32
    return %c0_i32, %c0_i32_0 : i32, i32
  }
  func.func @transform_12(%arg0: i32) -> (i32, i32) {
    %c0_i32 = arith.constant 0 : i32
    %c0_i32_0 = arith.constant 0 : i32
    %c0_i32_1 = arith.constant 0 : i32
    return %c0_i32, %c0_i32_0 : i32, i32
  }
  func.func @transform_13(%arg0: i32) -> (i32, i32) {
    %c0_i32 = arith.constant 0 : i32
    %c0_i32_0 = arith.constant 0 : i32
    return %arg0, %c0_i32 : i32, i32
  }
}

</mosaic_0001>

<llo_original>
// kernel: tpu_custom_call.1
$region0: #{tpu_custom_call.1}
  #allocation0 [shape = 'u32[]', space=smem, size = 0x4, offset = 0x4, fixed_abs, tag = 'smem constant byte address 0x4 - core index']
  #allocation1 [shape = 'u32[144,128]{1,0:T(1,128)}', space=vmem, size = 0x12000, scoped, tag = 'internal scratch']
  %s0 = inlined_call_operand.hbm [shape: f32[32,128], index: 0, kind: input, shape index: {}]
  %s1 = inlined_call_operand.hbm [shape: bf16[2,128,128], index: 1, kind: input, shape index: {}]
  %s2 = inlined_call_operand.vmem [shape: f32[1,128], index: 2, kind: input, shape index: {}]
  %s3 = inlined_call_operand.hbm [shape: bf16[2,128,128], index: 3, kind: input, shape index: {}]
  %s4 = inlined_call_operand.vmem [shape: f32[1,128], index: 4, kind: input, shape index: {}]
  %s5 = inlined_call_operand.hbm [shape: bf16[128,128], index: 5, kind: input, shape index: {}]
  %s6 = inlined_call_operand.vmem [shape: f32[1,128], index: 6, kind: input, shape index: {}]
  %s7 = inlined_call_operand.hbm [shape: bf16[2,128,128], index: 7, kind: input, shape index: {}]
  %s8 = inlined_call_operand.vmem [shape: f32[1,128], index: 8, kind: input, shape index: {}]
  %s9 = inlined_call_operand.hbm [shape: bf16[2,128,128], index: 9, kind: input, shape index: {}]
  %s10 = inlined_call_operand.vmem [shape: f32[1,128], index: 10, kind: input, shape index: {}]
  %s11 = inlined_call_operand.hbm [shape: bf16[128,128], index: 11, kind: input, shape index: {}]
  %s12 = inlined_call_operand.vmem [shape: f32[1,128], index: 12, kind: input, shape index: {}]
  %s13 = inlined_call_operand.hbm [shape: f32[32,128], index: 13, kind: output, shape index: {}]
  %s14 = sld [smem:[#allocation0]]
  $region90: #{tpu_custom_call.1} parent=0
    _
  %s16 = ssub.s32 1, %s14
  %s17 = scalar_select 0, %s16, %s14
  $region1: #{tpu_custom_call.1} parent=0
    #allocation2 [shape = 'u8[16384]{0}', space=vmem, size = 0x4000, scoped, tag = 'input window, operand 0, single buffered']
    #allocation3 [shape = 's32[1]{0}', space=sflag, size = 0x4, scoped, tag = 'scoped memory for tpu_custom_call.1']
    #allocation4 [shape = 's32[1]{0}', space=sflag, size = 0x4, scoped, tag = 'scoped memory for tpu_custom_call.1']
    #allocation5 [shape = 'u8[65536]{0}', space=vmem, size = 0x10000, scoped, tag = 'input window, operand 1, single buffered']
    #allocation6 [shape = 's32[1]{0}', space=sflag, size = 0x4, scoped, tag = 'scoped memory for tpu_custom_call.1']
    #allocation7 [shape = 'u8[65536]{0}', space=vmem, size = 0x10000, scoped, tag = 'input window, operand 3, single buffered']
    #allocation8 [shape = 'u8[32768]{0}', space=vmem, size = 0x8000, scoped, tag = 'input window, operand 5, single buffered']
    #allocation9 [shape = 's32[1]{0}', space=sflag, size = 0x4, scoped, tag = 'scoped memory for tpu_custom_call.1']
    #allocation10 [shape = 'u8[65536]{0}', space=vmem, size = 0x10000, scoped, tag = 'input window, operand 7, single buffered']
    #allocation11 [shape = 'u8[65536]{0}', space=vmem, size = 0x10000, scoped, tag = 'input window, operand 9, single buffered']
    #allocation12 [shape = 's32[1]{0}', space=sflag, size = 0x4, scoped, tag = 'scoped memory for tpu_custom_call.1']
    #allocation13 [shape = 'u8[32768]{0}', space=vmem, size = 0x8000, scoped, tag = 'input window, operand 11, single buffered']
    #allocation14 [shape = 'u8[16384]{0}', space=vmem, size = 0x4000, scoped, tag = 'output window, operand 0, single buffered']
    %18 = vsyncpa [#allocation3], 0
    %19 = vsyncpa [#allocation6], 0
    %20 = vsyncpa [#allocation9], 0
    %21 = vsyncpa [#allocation12], 0
    %22 = vsyncpa [#allocation4], 0
    // Predicated region
    $region2: #{tpu_custom_call.1} parent=1 // pred_check
      _
    $region3: #{tpu_custom_call.1} parent=1 // pred_check_branch
      %24 = sbr.rel (0) target = $region5
    $region4: #{tpu_custom_call.1} parent=1 // pred_region
      %s26 = ssub.s32 512, 512
      %27 = vsyncadd [#allocation3], %s26
      %s28 = sshll.u32 [#allocation2], 4
      %s29 = int_to_ptr.vmem [resolvable:$true] %s28
      %34 = dma.hbm_to_vmem [thread:$0]  %s0, 512, %s29, [#allocation3], 128, 128, 8
    $region5: #{tpu_custom_call.1} parent=1 // pred_fallthru
      _
    // Predicated region
    $region6: #{tpu_custom_call.1} parent=1 // pred_check
      _
    $region7: #{tpu_custom_call.1} parent=1 // pred_check_branch
      %36 = sbr.rel (0) target = $region9
    $region8: #{tpu_custom_call.1} parent=1 // pred_region
      %s38 = ssub.s32 2048, 2048
      %39 = vsyncadd [#allocation6], %s38
      %s40 = sshll.u32 [#allocation5], 4
      %s41 = int_to_ptr.vmem [resolvable:$true] %s40
      %46 = dma.hbm_to_vmem [thread:$0]  %s1, 2048, %s41, [#allocation6], 64, 64, 4
    $region9: #{tpu_custom_call.1} parent=1 // pred_fallthru
      _
    // Predicated region
    $region10: #{tpu_custom_call.1} parent=1 // pred_check
      _
    $region11: #{tpu_custom_call.1} parent=1 // pred_check_branch
      %48 = sbr.rel (0) target = $region13
    $region12: #{tpu_custom_call.1} parent=1 // pred_region
      _
    $region13: #{tpu_custom_call.1} parent=1 // pred_fallthru
      _
    // Predicated region
    $region14: #{tpu_custom_call.1} parent=1 // pred_check
      _
    $region15: #{tpu_custom_call.1} parent=1 // pred_check_branch
      %50 = sbr.rel (0) target = $region17
    $region16: #{tpu_custom_call.1} parent=1 // pred_region
      %s52 = ssub.s32 2048, 2048
      %53 = vsyncadd [#allocation6], %s52
      %s54 = sshll.u32 [#allocation7], 4
      %s55 = int_to_ptr.vmem [resolvable:$true] %s54
      %60 = dma.hbm_to_vmem [thread:$0]  %s3, 2048, %s55, [#allocation6], 64, 64, 4
    $region17: #{tpu_custom_call.1} parent=1 // pred_fallthru
      _
    // Predicated region
    $region18: #{tpu_custom_call.1} parent=1 // pred_check
      _
    $region19: #{tpu_custom_call.1} parent=1 // pred_check_branch
      %62 = sbr.rel (0) target = $region21
    $region20: #{tpu_custom_call.1} parent=1 // pred_region
      _
    $region21: #{tpu_custom_call.1} parent=1 // pred_fallthru
      _
    // Predicated region
    $region22: #{tpu_custom_call.1} parent=1 // pred_check
      _
    $region23: #{tpu_custom_call.1} parent=1 // pred_check_branch
      %64 = sbr.rel (0) target = $region25
    $region24: #{tpu_custom_call.1} parent=1 // pred_region
      %s66 = ssub.s32 1024, 1024
      %67 = vsyncadd [#allocation9], %s66
      %s68 = sshll.u32 [#allocation8], 4
      %s69 = int_to_ptr.vmem [resolvable:$true] %s68
      %74 = dma.hbm_to_vmem [thread:$0]  %s5, 1024, %s69, [#allocation9], 64, 64, 4
    $region25: #{tpu_custom_call.1} parent=1 // pred_fallthru
      _
    // Predicated region
    $region26: #{tpu_custom_call.1} parent=1 // pred_check
      _
    $region27: #{tpu_custom_call.1} parent=1 // pred_check_branch
      %76 = sbr.rel (0) target = $region29
    $region28: #{tpu_custom_call.1} parent=1 // pred_region
      _
    $region29: #{tpu_custom_call.1} parent=1 // pred_fallthru
      _
    // Predicated region
    $region30: #{tpu_custom_call.1} parent=1 // pred_check
      _
    $region31: #{tpu_custom_call.1} parent=1 // pred_check_branch
      %78 = sbr.rel (0) target = $region33
    $region32: #{tpu_custom_call.1} parent=1 // pred_region
      %s80 = ssub.s32 2048, 2048
      %81 = vsyncadd [#allocation9], %s80
      %s82 = sshll.u32 [#allocation10], 4
      %s83 = int_to_ptr.vmem [resolvable:$true] %s82
      %88 = dma.hbm_to_vmem [thread:$0]  %s7, 2048, %s83, [#allocation9], 64, 64, 4
    $region33: #{tpu_custom_call.1} parent=1 // pred_fallthru
      _
    // Predicated region
    $region34: #{tpu_custom_call.1} parent=1 // pred_check
      _
    $region35: #{tpu_custom_call.1} parent=1 // pred_check_branch
      %90 = sbr.rel (0) target = $region37
    $region36: #{tpu_custom_call.1} parent=1 // pred_region
      _
    $region37: #{tpu_custom_call.1} parent=1 // pred_fallthru
      _
    // Predicated region
    $region38: #{tpu_custom_call.1} parent=1 // pred_check
      _
    $region39: #{tpu_custom_call.1} parent=1 // pred_check_branch
      %92 = sbr.rel (0) target = $region41
    $region40: #{tpu_custom_call.1} parent=1 // pred_region
      %s94 = ssub.s32 2048, 2048
      %95 = vsyncadd [#allocation12], %s94
      %s96 = sshll.u32 [#allocation11], 4
      %s97 = int_to_ptr.vmem [resolvable:$true] %s96
      %102 = dma.hbm_to_vmem [thread:$0]  %s9, 2048, %s97, [#allocation12], 64, 64, 4
    $region41: #{tpu_custom_call.1} parent=1 // pred_fallthru
      _
    // Predicated region
    $region42: #{tpu_custom_call.1} parent=1 // pred_check
      _
    $region43: #{tpu_custom_call.1} parent=1 // pred_check_branch
      %104 = sbr.rel (0) target = $region45
    $region44: #{tpu_custom_call.1} parent=1 // pred_region
      _
    $region45: #{tpu_custom_call.1} parent=1 // pred_fallthru
      _
    // Predicated region
    $region46: #{tpu_custom_call.1} parent=1 // pred_check
      _
    $region47: #{tpu_custom_call.1} parent=1 // pred_check_branch
      %106 = sbr.rel (0) target = $region49
    $region48: #{tpu_custom_call.1} parent=1 // pred_region
      %s108 = ssub.s32 1024, 1024
      %109 = vsyncadd [#allocation12], %s108
      %s110 = sshll.u32 [#allocation13], 4
      %s111 = int_to_ptr.vmem [resolvable:$true] %s110
      %116 = dma.hbm_to_vmem [thread:$0]  %s11, 1024, %s111, [#allocation12], 64, 64, 4
    $region49: #{tpu_custom_call.1} parent=1 // pred_fallthru
      _
    // Predicated region
    $region50: #{tpu_custom_call.1} parent=1 // pred_check
      _
    $region51: #{tpu_custom_call.1} parent=1 // pred_check_branch
      %118 = sbr.rel (0) target = $region53
    $region52: #{tpu_custom_call.1} parent=1 // pred_region
      _
    $region53: #{tpu_custom_call.1} parent=1 // pred_fallthru
      _
    // Predicated region
    $region54: #{tpu_custom_call.1} parent=1 // pred_check
      _
    $region55: #{tpu_custom_call.1} parent=1 // pred_check_branch
      %120 = sbr.rel (0) target = $region57
    $region56: #{tpu_custom_call.1} parent=1 // pred_region
      %121 = dma.done [#allocation3], 512
    $region57: #{tpu_custom_call.1} parent=1 // pred_fallthru
      _
    // Predicated region
    $region58: #{tpu_custom_call.1} parent=1 // pred_check
      _
    $region59: #{tpu_custom_call.1} parent=1 // pred_check_branch
      %123 = sbr.rel (0) target = $region61
    $region60: #{tpu_custom_call.1} parent=1 // pred_region
      %124 = dma.done [#allocation6], 2048
    $region61: #{tpu_custom_call.1} parent=1 // pred_fallthru
      _
    // Predicated region
    $region62: #{tpu_custom_call.1} parent=1 // pred_check
      _
    $region63: #{tpu_custom_call.1} parent=1 // pred_check_branch
      %126 = sbr.rel (0) target = $region65
    $region64: #{tpu_custom_call.1} parent=1 // pred_region
      %127 = dma.done [#allocation6], 2048
    $region65: #{tpu_custom_call.1} parent=1 // pred_fallthru
      _
    // Predicated region
    $region66: #{tpu_custom_call.1} parent=1 // pred_check
      _
    $region67: #{tpu_custom_call.1} parent=1 // pred_check_branch
      %129 = sbr.rel (0) target = $region69
    $region68: #{tpu_custom_call.1} parent=1 // pred_region
      %130 = dma.done [#allocation9], 1024
    $region69: #{tpu_custom_call.1} parent=1 // pred_fallthru
      _
    // Predicated region
    $region70: #{tpu_custom_call.1} parent=1 // pred_check
      _
    $region71: #{tpu_custom_call.1} parent=1 // pred_check_branch
      %132 = sbr.rel (0) target = $region73
    $region72: #{tpu_custom_call.1} parent=1 // pred_region
      %133 = dma.done [#allocation9], 2048
    $region73: #{tpu_custom_call.1} parent=1 // pred_fallthru
      _
    // Predicated region
    $region74: #{tpu_custom_call.1} parent=1 // pred_check
      _
    $region75: #{tpu_custom_call.1} parent=1 // pred_check_branch
      %135 = sbr.rel (0) target = $region77
    $region76: #{tpu_custom_call.1} parent=1 // pred_region
      %136 = dma.done [#allocation12], 2048
    $region77: #{tpu_custom_call.1} parent=1 // pred_fallthru
      _
    // Predicated region
    $region78: #{tpu_custom_call.1} parent=1 // pred_check
      _
    $region79: #{tpu_custom_call.1} parent=1 // pred_check_branch
      %138 = sbr.rel (0) target = $region81
    $region80: #{tpu_custom_call.1} parent=1 // pred_region
      %139 = dma.done [#allocation12], 1024
    $region81: #{tpu_custom_call.1} parent=1 // pred_fallthru
      _
    %v141 = vlaneseq
    %v142 = vshrl.u32 %v141, 7
    %v143 = vadd.s32 %v142, 8
    %v144 = vadd.s32 %v142, 16
    %v145 = vadd.s32 %v142, 24
    %vm146 = vcmp.lt.s32.totalorder %v142, 0
    %v147 = vsub.s32 0, %v142
    %v148 = vsel %vm146, %v147, %v142
    %v149 = vshrl.u32 %v148, 4
    %v150 = vand.u32 %v148, 15
    %v151 = vsub.s32 0, %v150
    %v152 = vsel %vm146, %v151, %v150
    %vm153 = vcmp.lt.s32.totalorder %v143, 0
    %v154 = vsub.s32 0, %v143
    %v155 = vsel %vm153, %v154, %v143
    %v156 = vshrl.u32 %v155, 4
    %v157 = vand.u32 %v155, 15
    %v158 = vsub.s32 0, %v157
    %v159 = vsel %vm153, %v158, %v157
    %vm160 = vcmp.lt.s32.totalorder %v144, 0
    %v161 = vsub.s32 0, %v144
    %v162 = vsel %vm160, %v161, %v144
    %v163 = vshrl.u32 %v162, 4
    %v164 = vand.u32 %v162, 15
    %v165 = vsub.s32 0, %v164
    %v166 = vsel %vm160, %v165, %v164
    %vm167 = vcmp.lt.s32.totalorder %v145, 0
    %v168 = vsub.s32 0, %v145
    %v169 = vsel %vm167, %v168, %v145
    %v170 = vshrl.u32 %v169, 4
    %v171 = vand.u32 %v169, 15
    %v172 = vsub.s32 0, %v171
    %v173 = vsel %vm167, %v172, %v171
    %vm174 = vcmp.ne.s32.totalorder %v152, 0
    %vm175 = vcmp.ne.s32.totalorder %v159, 0
    %vm176 = vcmp.ne.s32.totalorder %v166, 0
    %vm177 = vcmp.ne.s32.totalorder %v173, 0
    %vm178 = vcmp.lt.s32.totalorder %v152, 0
    %vm179 = vcmp.lt.s32.totalorder %v159, 0
    %vm180 = vcmp.lt.s32.totalorder %v166, 0
    %vm181 = vcmp.lt.s32.totalorder %v173, 0
    %vm182 = vmand %vm178, %vm174
    %vm183 = vmand %vm179, %vm175
    %vm184 = vmand %vm180, %vm176
    %vm185 = vmand %vm181, %vm177
    %v186 = vadd.s32 %v152, 16
    %v187 = vadd.s32 %v159, 16
    %v188 = vadd.s32 %v166, 16
    %v189 = vadd.s32 %v173, 16
    %v190 = vsel %vm182, %v186, %v152
    %v191 = vsel %vm183, %v187, %v159
    %v192 = vsel %vm184, %v188, %v166
    %v193 = vsel %vm185, %v189, %v173
    %v194 = vld [vmem:[#allocation2] sm:$0xff]
    %v195 = vld [vmem:[#allocation2 + $0x8] sm:$0xff]
    %v196 = vld [vmem:[#allocation2 + $0x10] sm:$0xff]
    %v197 = vld [vmem:[#allocation2 + $0x18] sm:$0xff]
    %v198 = vrot.slane %v194, 7
    %v199 = vrot.slane %v195, 7
    %v200 = vrot.slane %v196, 7
    %v201 = vrot.slane %v197, 7
    %vm202 = vcmp.lt.s32.totalorder %v142, 1
    %v203 = vsel %vm202, %v200, %v201
    %v204 = vsel %vm202, %v199, %v200
    %v205 = vsel %vm202, %v198, %v199
    %v206 = vsel %vm202, %v201, %v198
    %vm207 = vcmp.ge.s32.totalorder %v190, 1
    %vm208 = vcmp.ge.s32.totalorder %v191, 1
    %vm209 = vcmp.ge.s32.totalorder %v192, 1
    %vm210 = vcmp.ge.s32.totalorder %v193, 1
    %v211 = vsel %vm207, 1, 0
    %v212 = vsel %vm208, 1, 0
    %v213 = vsel %vm209, 1, 0
    %v214 = vsel %vm210, 1, 0
    %vm215 = vcmp.eq.s32.totalorder %v211, 1
    %vm216 = vcmp.eq.s32.totalorder %v212, 1
    %vm217 = vcmp.eq.s32.totalorder %v213, 1
    %vm218 = vcmp.eq.s32.totalorder %v214, 1
    %v219 = vsel %vm215, %v206, 0.0
    %v220 = vsel %vm216, %v205, 0.0
    %v221 = vsel %vm217, %v204, 0.0
    %v222 = vsel %vm218, %v203, 0.0
    %v223 = vpack.c.bf16 %v220, %v219
    %v224 = vpack.c.bf16 %v222, %v221
    %v225 = vld [vmem:[#allocation5] sm:$0xf]
    %v226 = vld [vmem:[#allocation5 + $0x4] sm:$0xf]
    %v227 = vld [vmem:[#allocation5 + $0x8] sm:$0xf]
    %v228 = vld [vmem:[#allocation5 + $0xc] sm:$0xf]
    %v229 = vld [vmem:[#allocation5 + $0x10] sm:$0xf]
    %v230 = vld [vmem:[#allocation5 + $0x14] sm:$0xf]
    %v231 = vld [vmem:[#allocation5 + $0x18] sm:$0xf]
    %v232 = vld [vmem:[#allocation5 + $0x1c] sm:$0xf]
    %v233 = vld [vmem:[#allocation5 + $0x20] sm:$0xf]
    %v234 = vld [vmem:[#allocation5 + $0x24] sm:$0xf]
    %v235 = vld [vmem:[#allocation5 + $0x28] sm:$0xf]
    %v236 = vld [vmem:[#allocation5 + $0x2c] sm:$0xf]
    %v237 = vld [vmem:[#allocation5 + $0x30] sm:$0xf]
    %v238 = vld [vmem:[#allocation5 + $0x34] sm:$0xf]
    %v239 = vld [vmem:[#allocation5 + $0x38] sm:$0xf]
    %v240 = vld [vmem:[#allocation5 + $0x3c] sm:$0xf]
    %v241 = vpack.c.bf16 %v195, %v194
    %v242 = vpack.c.bf16 %v197, %v196
    %s243 = scalar_lea.vmem [#allocation5], 64
    %v244 = vld [vmem:[%s243] sm:$0xf]
    %v245 = vld [vmem:[%s243 + $0x4] sm:$0xf]
    %v246 = vld [vmem:[%s243 + $0x8] sm:$0xf]
    %v247 = vld [vmem:[%s243 + $0xc] sm:$0xf]
    %v248 = vld [vmem:[%s243 + $0x10] sm:$0xf]
    %v249 = vld [vmem:[%s243 + $0x14] sm:$0xf]
    %v250 = vld [vmem:[%s243 + $0x18] sm:$0xf]
    %v251 = vld [vmem:[%s243 + $0x1c] sm:$0xf]
    %v252 = vld [vmem:[%s243 + $0x20] sm:$0xf]
    %v253 = vld [vmem:[%s243 + $0x24] sm:$0xf]
    %v254 = vld [vmem:[%s243 + $0x28] sm:$0xf]
    %v255 = vld [vmem:[%s243 + $0x2c] sm:$0xf]
    %v256 = vld [vmem:[%s243 + $0x30] sm:$0xf]
    %v257 = vld [vmem:[%s243 + $0x34] sm:$0xf]
    %v258 = vld [vmem:[%s243 + $0x38] sm:$0xf]
    %v259 = vld [vmem:[%s243 + $0x3c] sm:$0xf]
    %v276 = vunpack.c.l.b16 %v244
    %v277 = vunpack.c.l.b16 %v245
    %v278 = vunpack.c.l.b16 %v246
    %v279 = vunpack.c.l.b16 %v247
    %v280 = vunpack.c.l.b16 %v248
    %v281 = vunpack.c.l.b16 %v249
    %v282 = vunpack.c.l.b16 %v250
    %v283 = vunpack.c.l.b16 %v251
    %v284 = vunpack.c.l.b16 %v252
    %v285 = vunpack.c.l.b16 %v253
    %v286 = vunpack.c.l.b16 %v254
    %v287 = vunpack.c.l.b16 %v255
    %v288 = vunpack.c.l.b16 %v256
    %v289 = vunpack.c.l.b16 %v257
    %v290 = vunpack.c.l.b16 %v258
    %v291 = vunpack.c.l.b16 %v259
    %v292 = vpack.c.b16 %v277, %v276
    %v293 = vpack.c.b16 %v279, %v278
    %v294 = vpack.c.b16 %v281, %v280
    %v295 = vpack.c.b16 %v283, %v282
    %v296 = vpack.c.b16 %v285, %v284
    %v297 = vpack.c.b16 %v287, %v286
    %v298 = vpack.c.b16 %v289, %v288
    %v299 = vpack.c.b16 %v291, %v290
    %308 = vmatprep.subr.bf16.mxu0 0
    %309 = vmatpush1.bf16.msra.mxu0 %v292
    %310 = vmatprep.subr.bf16.mxu0 0
    %311 = vmatpush1.bf16.msra.mxu0 %v293
    %312 = vmatprep.subr.bf16.mxu0 0
    %313 = vmatpush1.bf16.msra.mxu0 %v294
    %314 = vmatprep.subr.bf16.mxu0 0
    %315 = vmatpush1.bf16.msra.mxu0 %v295
    %316 = vmatprep.subr.bf16.mxu0 0
    %317 = vmatpush1.bf16.msra.mxu0 %v296
    %318 = vmatprep.subr.bf16.mxu0 0
    %319 = vmatpush1.bf16.msra.mxu0 %v297
    %320 = vmatprep.subr.bf16.mxu0 0
    %321 = vmatpush1.bf16.msra.mxu0 %v298
    %322 = vmatprep.subr.bf16.mxu0 0
    %323 = vmatpush1.bf16.msra.mxu0 %v299
    %324 = vmatprep.subr.bf16.mxu0 0
    %325 = vmatpush1.bf16.msra.mxu0 0
    %326 = vmatprep.subr.bf16.mxu0 0
    %327 = vmatpush1.bf16.msra.mxu0 0
    %328 = vmatprep.subr.bf16.mxu0 0
    %329 = vmatpush1.bf16.msra.mxu0 0
    %330 = vmatprep.subr.bf16.mxu0 0
    %331 = vmatpush1.bf16.msra.mxu0 0
    %332 = vmatprep.subr.bf16.mxu0 0
    %333 = vmatpush1.bf16.msra.mxu0 0
    %334 = vmatprep.subr.bf16.mxu0 0
    %335 = vmatpush1.bf16.msra.mxu0 0
    %336 = vmatprep.subr.bf16.mxu0 0
    %337 = vmatpush1.bf16.msra.mxu0 0
    %338 = vmatprep.subr.bf16.mxu0 0
    %339 = vmatpush1.bf16.msra.mxu0 0
    %340 = vmatprep.mubr.bf16.mxu0 0
    %341 = vmatmul.mubr.bf16.gmra.mrb[0].mxu0 %v241
    %v342 = vpop.f32.mrb[0].mxu0
    %v343 = vadd.f32 0.0, %v342
    %v344 = vpop.f32.mrb[0].mxu0
    %v345 = vpop.f32.mrb[0].mxu0
    %v346 = vadd.f32 0.0, %v345
    %v347 = vpop.f32.mrb[0].mxu0
    %348 = vmatprep.mubr.bf16.mxu0 0
    %349 = vmatmul.mubr.bf16.gmra.mrb[0].mxu0 %v242
    %v350 = vpop.f32.mrb[0].mxu0
    %v351 = vadd.f32 0.0, %v350
    %v352 = vpop.f32.mrb[0].mxu0
    %v353 = vpop.f32.mrb[0].mxu0
    %v354 = vadd.f32 0.0, %v353
    %v355 = vpop.f32.mrb[0].mxu0
    %356 = vdwg.mxu0
    %v373 = vunpack.c.l.b16 %v225
    %v374 = vunpack.c.l.b16 %v226
    %v375 = vunpack.c.l.b16 %v227
    %v376 = vunpack.c.l.b16 %v228
    %v377 = vunpack.c.l.b16 %v229
    %v378 = vunpack.c.l.b16 %v230
    %v379 = vunpack.c.l.b16 %v231
    %v380 = vunpack.c.l.b16 %v232
    %v381 = vunpack.c.l.b16 %v233
    %v382 = vunpack.c.l.b16 %v234
    %v383 = vunpack.c.l.b16 %v235
    %v384 = vunpack.c.l.b16 %v236
    %v385 = vunpack.c.l.b16 %v237
    %v386 = vunpack.c.l.b16 %v238
    %v387 = vunpack.c.l.b16 %v239
    %v388 = vunpack.c.l.b16 %v240
    %v389 = vpack.c.b16 %v374, %v373
    %v390 = vpack.c.b16 %v376, %v375
    %v391 = vpack.c.b16 %v378, %v377
    %v392 = vpack.c.b16 %v380, %v379
    %v393 = vpack.c.b16 %v382, %v381
    %v394 = vpack.c.b16 %v384, %v383
    %v395 = vpack.c.b16 %v386, %v385
    %v396 = vpack.c.b16 %v388, %v387
    %405 = vmatprep.subr.bf16.mxu0 0
    %406 = vmatpush1.bf16.msra.mxu0 %v389
    %407 = vmatprep.subr.bf16.mxu0 0
    %408 = vmatpush1.bf16.msra.mxu0 %v390
    %409 = vmatprep.subr.bf16.mxu0 0
    %410 = vmatpush1.bf16.msra.mxu0 %v391
    %411 = vmatprep.subr.bf16.mxu0 0
    %412 = vmatpush1.bf16.msra.mxu0 %v392
    %413 = vmatprep.subr.bf16.mxu0 0
    %414 = vmatpush1.bf16.msra.mxu0 %v393
    %415 = vmatprep.subr.bf16.mxu0 0
    %416 = vmatpush1.bf16.msra.mxu0 %v394
    %417 = vmatprep.subr.bf16.mxu0 0
    %418 = vmatpush1.bf16.msra.mxu0 %v395
    %419 = vmatprep.subr.bf16.mxu0 0
    %420 = vmatpush1.bf16.msra.mxu0 %v396
    %421 = vmatprep.subr.bf16.mxu0 0
    %422 = vmatpush1.bf16.msra.mxu0 0
    %423 = vmatprep.subr.bf16.mxu0 0
    %424 = vmatpush1.bf16.msra.mxu0 0
    %425 = vmatprep.subr.bf16.mxu0 0
    %426 = vmatpush1.bf16.msra.mxu0 0
    %427 = vmatprep.subr.bf16.mxu0 0
    %428 = vmatpush1.bf16.msra.mxu0 0
    %429 = vmatprep.subr.bf16.mxu0 0
    %430 = vmatpush1.bf16.msra.mxu0 0
    %431 = vmatprep.subr.bf16.mxu0 0
    %432 = vmatpush1.bf16.msra.mxu0 0
    %433 = vmatprep.subr.bf16.mxu0 0
    %434 = vmatpush1.bf16.msra.mxu0 0
    %435 = vmatprep.subr.bf16.mxu0 0
    %436 = vmatpush1.bf16.msra.mxu0 0
    %437 = vmatprep.mubr.bf16.mxu0 0
    %438 = vmatmul.mubr.bf16.gmra.mrb[0].mxu0 %v223
    %v439 = vpop.f32.mrb[0].mxu0
    %v440 = vadd.f32 %v343, %v439
    %v441 = vpop.f32.mrb[0].mxu0
    %v442 = vpop.f32.mrb[0].mxu0
    %v443 = vadd.f32 %v346, %v442
    %v444 = vpop.f32.mrb[0].mxu0
    %445 = vmatprep.mubr.bf16.mxu0 0
    %446 = vmatmul.mubr.bf16.gmra.mrb[0].mxu0 %v224
    %v447 = vpop.f32.mrb[0].mxu0
    %v448 = vadd.f32 %v351, %v447
    %v449 = vpop.f32.mrb[0].mxu0
    %v450 = vpop.f32.mrb[0].mxu0
    %v451 = vadd.f32 %v354, %v450
    %v452 = vpop.f32.mrb[0].mxu0
    %453 = vdwg.mxu0
    %v454 = vld [vmem:[%s2] sm:$0x1]
    %v456 = vlaneseq
    %v457 = vshrl.u32 %v456, 7
    %v458 = vsub.s32 0, %v457
    %v459 = vrot.slane %v454, %v458
    %v461 = vadd.f32 %v440, %v459
    %v462 = vadd.f32 %v443, %v459
    %v463 = vadd.f32 %v448, %v459
    %v464 = vadd.f32 %v451, %v459
    %v465 = vmax.f32 %v461, 0.0
    %v466 = vmax.f32 %v462, 0.0
    %v467 = vmax.f32 %v463, 0.0
    %v468 = vmax.f32 %v464, 0.0
    %v469 = vrot.slane %v465, 7
    %v470 = vrot.slane %v466, 7
    %v471 = vrot.slane %v467, 7
    %v472 = vrot.slane %v468, 7
    %v473 = vsel %vm202, %v471, %v472
    %v474 = vsel %vm202, %v470, %v471
    %v475 = vsel %vm202, %v469, %v470
    %v476 = vsel %vm202, %v472, %v469
    %v477 = vsel %vm215, %v476, 0.0
    %v478 = vsel %vm216, %v475, 0.0
    %v479 = vsel %vm217, %v474, 0.0
    %v480 = vsel %vm218, %v473, 0.0
    %v481 = vpack.c.bf16 %v478, %v477
    %v482 = vpack.c.bf16 %v480, %v479
    %v483 = vld [vmem:[#allocation7] sm:$0xf]
    %v484 = vld [vmem:[#allocation7 + $0x4] sm:$0xf]
    %v485 = vld [vmem:[#allocation7 + $0x8] sm:$0xf]
    %v486 = vld [vmem:[#allocation7 + $0xc] sm:$0xf]
    %v487 = vld [vmem:[#allocation7 + $0x10] sm:$0xf]
    %v488 = vld [vmem:[#allocation7 + $0x14] sm:$0xf]
    %v489 = vld [vmem:[#allocation7 + $0x18] sm:$0xf]
    %v490 = vld [vmem:[#allocation7 + $0x1c] sm:$0xf]
    %v491 = vld [vmem:[#allocation7 + $0x20] sm:$0xf]
    %v492 = vld [vmem:[#allocation7 + $0x24] sm:$0xf]
    %v493 = vld [vmem:[#allocation7 + $0x28] sm:$0xf]
    %v494 = vld [vmem:[#allocation7 + $0x2c] sm:$0xf]
    %v495 = vld [vmem:[#allocation7 + $0x30] sm:$0xf]
    %v496 = vld [vmem:[#allocation7 + $0x34] sm:$0xf]
    %v497 = vld [vmem:[#allocation7 + $0x38] sm:$0xf]
    %v498 = vld [vmem:[#allocation7 + $0x3c] sm:$0xf]
    %v499 = vpack.c.bf16 %v466, %v465
    %v500 = vpack.c.bf16 %v468, %v467
    %s501 = scalar_lea.vmem [#allocation7], 64
    %v502 = vld [vmem:[%s501] sm:$0xf]
    %v503 = vld [vmem:[%s501 + $0x4] sm:$0xf]
    %v504 = vld [vmem:[%s501 + $0x8] sm:$0xf]
    %v505 = vld [vmem:[%s501 + $0xc] sm:$0xf]
    %v506 = vld [vmem:[%s501 + $0x10] sm:$0xf]
    %v507 = vld [vmem:[%s501 + $0x14] sm:$0xf]
    %v508 = vld [vmem:[%s501 + $0x18] sm:$0xf]
    %v509 = vld [vmem:[%s501 + $0x1c] sm:$0xf]
    %v510 = vld [vmem:[%s501 + $0x20] sm:$0xf]
    %v511 = vld [vmem:[%s501 + $0x24] sm:$0xf]
    %v512 = vld [vmem:[%s501 + $0x28] sm:$0xf]
    %v513 = vld [vmem:[%s501 + $0x2c] sm:$0xf]
    %v514 = vld [vmem:[%s501 + $0x30] sm:$0xf]
    %v515 = vld [vmem:[%s501 + $0x34] sm:$0xf]
    %v516 = vld [vmem:[%s501 + $0x38] sm:$0xf]
    %v517 = vld [vmem:[%s501 + $0x3c] sm:$0xf]
    %v534 = vunpack.c.l.b16 %v502
    %v535 = vunpack.c.l.b16 %v503
    %v536 = vunpack.c.l.b16 %v504
    %v537 = vunpack.c.l.b16 %v505
    %v538 = vunpack.c.l.b16 %v506
    %v539 = vunpack.c.l.b16 %v507
    %v540 = vunpack.c.l.b16 %v508
    %v541 = vunpack.c.l.b16 %v509
    %v542 = vunpack.c.l.b16 %v510
    %v543 = vunpack.c.l.b16 %v511
    %v544 = vunpack.c.l.b16 %v512
    %v545 = vunpack.c.l.b16 %v513
    %v546 = vunpack.c.l.b16 %v514
    %v547 = vunpack.c.l.b16 %v515
    %v548 = vunpack.c.l.b16 %v516
    %v549 = vunpack.c.l.b16 %v517
    %v550 = vpack.c.b16 %v535, %v534
    %v551 = vpack.c.b16 %v537, %v536
    %v552 = vpack.c.b16 %v539, %v538
    %v553 = vpack.c.b16 %v541, %v540
    %v554 = vpack.c.b16 %v543, %v542
    %v555 = vpack.c.b16 %v545, %v544
    %v556 = vpack.c.b16 %v547, %v546
    %v557 = vpack.c.b16 %v549, %v548
    %566 = vmatprep.subr.bf16.mxu0 0
    %567 = vmatpush1.bf16.msra.mxu0 %v550
    %568 = vmatprep.subr.bf16.mxu0 0
    %569 = vmatpush1.bf16.msra.mxu0 %v551
    %570 = vmatprep.subr.bf16.mxu0 0
    %571 = vmatpush1.bf16.msra.mxu0 %v552
    %572 = vmatprep.subr.bf16.mxu0 0
    %573 = vmatpush1.bf16.msra.mxu0 %v553
    %574 = vmatprep.subr.bf16.mxu0 0
    %575 = vmatpush1.bf16.msra.mxu0 %v554
    %576 = vmatprep.subr.bf16.mxu0 0
    %577 = vmatpush1.bf16.msra.mxu0 %v555
    %578 = vmatprep.subr.bf16.mxu0 0
    %579 = vmatpush1.bf16.msra.mxu0 %v556
    %580 = vmatprep.subr.bf16.mxu0 0
    %581 = vmatpush1.bf16.msra.mxu0 %v557
    %582 = vmatprep.subr.bf16.mxu0 0
    %583 = vmatpush1.bf16.msra.mxu0 0
    %584 = vmatprep.subr.bf16.mxu0 0
    %585 = vmatpush1.bf16.msra.mxu0 0
    %586 = vmatprep.subr.bf16.mxu0 0
    %587 = vmatpush1.bf16.msra.mxu0 0
    %588 = vmatprep.subr.bf16.mxu0 0
    %589 = vmatpush1.bf16.msra.mxu0 0
    %590 = vmatprep.subr.bf16.mxu0 0
    %591 = vmatpush1.bf16.msra.mxu0 0
    %592 = vmatprep.subr.bf16.mxu0 0
    %593 = vmatpush1.bf16.msra.mxu0 0
    %594 = vmatprep.subr.bf16.mxu0 0
    %595 = vmatpush1.bf16.msra.mxu0 0
    %596 = vmatprep.subr.bf16.mxu0 0
    %597 = vmatpush1.bf16.msra.mxu0 0
    %598 = vmatprep.mubr.bf16.mxu0 0
    %599 = vmatmul.mubr.bf16.gmra.mrb[0].mxu0 %v499
    %v600 = vpop.f32.mrb[0].mxu0
    %v601 = vadd.f32 0.0, %v600
    %v602 = vpop.f32.mrb[0].mxu0
    %v603 = vpop.f32.mrb[0].mxu0
    %v604 = vadd.f32 0.0, %v603
    %v605 = vpop.f32.mrb[0].mxu0
    %606 = vmatprep.mubr.bf16.mxu0 0
    %607 = vmatmul.mubr.bf16.gmra.mrb[0].mxu0 %v500
    %v608 = vpop.f32.mrb[0].mxu0
    %v609 = vadd.f32 0.0, %v608
    %v610 = vpop.f32.mrb[0].mxu0
    %v611 = vpop.f32.mrb[0].mxu0
    %v612 = vadd.f32 0.0, %v611
    %v613 = vpop.f32.mrb[0].mxu0
    %614 = vdwg.mxu0
    %v631 = vunpack.c.l.b16 %v483
    %v632 = vunpack.c.l.b16 %v484
    %v633 = vunpack.c.l.b16 %v485
    %v634 = vunpack.c.l.b16 %v486
    %v635 = vunpack.c.l.b16 %v487
    %v636 = vunpack.c.l.b16 %v488
    %v637 = vunpack.c.l.b16 %v489
    %v638 = vunpack.c.l.b16 %v490
    %v639 = vunpack.c.l.b16 %v491
    %v640 = vunpack.c.l.b16 %v492
    %v641 = vunpack.c.l.b16 %v493
    %v642 = vunpack.c.l.b16 %v494
    %v643 = vunpack.c.l.b16 %v495
    %v644 = vunpack.c.l.b16 %v496
    %v645 = vunpack.c.l.b16 %v497
    %v646 = vunpack.c.l.b16 %v498
    %v647 = vpack.c.b16 %v632, %v631
    %v648 = vpack.c.b16 %v634, %v633
    %v649 = vpack.c.b16 %v636, %v635
    %v650 = vpack.c.b16 %v638, %v637
    %v651 = vpack.c.b16 %v640, %v639
    %v652 = vpack.c.b16 %v642, %v641
    %v653 = vpack.c.b16 %v644, %v643
    %v654 = vpack.c.b16 %v646, %v645
    %663 = vmatprep.subr.bf16.mxu0 0
    %664 = vmatpush1.bf16.msra.mxu0 %v647
    %665 = vmatprep.subr.bf16.mxu0 0
    %666 = vmatpush1.bf16.msra.mxu0 %v648
    %667 = vmatprep.subr.bf16.mxu0 0
    %668 = vmatpush1.bf16.msra.mxu0 %v649
    %669 = vmatprep.subr.bf16.mxu0 0
    %670 = vmatpush1.bf16.msra.mxu0 %v650
    %671 = vmatprep.subr.bf16.mxu0 0
    %672 = vmatpush1.bf16.msra.mxu0 %v651
    %673 = vmatprep.subr.bf16.mxu0 0
    %674 = vmatpush1.bf16.msra.mxu0 %v652
    %675 = vmatprep.subr.bf16.mxu0 0
    %676 = vmatpush1.bf16.msra.mxu0 %v653
    %677 = vmatprep.subr.bf16.mxu0 0
    %678 = vmatpush1.bf16.msra.mxu0 %v654
    %679 = vmatprep.subr.bf16.mxu0 0
    %680 = vmatpush1.bf16.msra.mxu0 0
    %681 = vmatprep.subr.bf16.mxu0 0
    %682 = vmatpush1.bf16.msra.mxu0 0
    %683 = vmatprep.subr.bf16.mxu0 0
    %684 = vmatpush1.bf16.msra.mxu0 0
    %685 = vmatprep.subr.bf16.mxu0 0
    %686 = vmatpush1.bf16.msra.mxu0 0
    %687 = vmatprep.subr.bf16.mxu0 0
    %688 = vmatpush1.bf16.msra.mxu0 0
    %689 = vmatprep.subr.bf16.mxu0 0
    %690 = vmatpush1.bf16.msra.mxu0 0
    %691 = vmatprep.subr.bf16.mxu0 0
    %692 = vmatpush1.bf16.msra.mxu0 0
    %693 = vmatprep.subr.bf16.mxu0 0
    %694 = vmatpush1.bf16.msra.mxu0 0
    %695 = vmatprep.mubr.bf16.mxu0 0
    %696 = vmatmul.mubr.bf16.gmra.mrb[0].mxu0 %v481
    %v697 = vpop.f32.mrb[0].mxu0
    %v698 = vadd.f32 %v601, %v697
    %v699 = vpop.f32.mrb[0].mxu0
    %v700 = vpop.f32.mrb[0].mxu0
    %v701 = vadd.f32 %v604, %v700
    %v702 = vpop.f32.mrb[0].mxu0
    %703 = vmatprep.mubr.bf16.mxu0 0
    %704 = vmatmul.mubr.bf16.gmra.mrb[0].mxu0 %v482
    %v705 = vpop.f32.mrb[0].mxu0
    %v706 = vadd.f32 %v609, %v705
    %v707 = vpop.f32.mrb[0].mxu0
    %v708 = vpop.f32.mrb[0].mxu0
    %v709 = vadd.f32 %v612, %v708
    %v710 = vpop.f32.mrb[0].mxu0
    %711 = vdwg.mxu0
    %v712 = vld [vmem:[%s4] sm:$0x1]
    %v714 = vlaneseq
    %v715 = vshrl.u32 %v714, 7
    %v716 = vsub.s32 0, %v715
    %v717 = vrot.slane %v712, %v716
    %v719 = vadd.f32 %v698, %v717
    %v720 = vadd.f32 %v701, %v717
    %v721 = vadd.f32 %v706, %v717
    %v722 = vadd.f32 %v709, %v717
    %v723 = vmax.f32 %v719, 0.0
    %v724 = vmax.f32 %v720, 0.0
    %v725 = vmax.f32 %v721, 0.0
    %v726 = vmax.f32 %v722, 0.0
    %v727 = vld [vmem:[#allocation8] sm:$0xf]
    %v728 = vld [vmem:[#allocation8 + $0x4] sm:$0xf]
    %v729 = vld [vmem:[#allocation8 + $0x8] sm:$0xf]
    %v730 = vld [vmem:[#allocation8 + $0xc] sm:$0xf]
    %v731 = vld [vmem:[#allocation8 + $0x10] sm:$0xf]
    %v732 = vld [vmem:[#allocation8 + $0x14] sm:$0xf]
    %v733 = vld [vmem:[#allocation8 + $0x18] sm:$0xf]
    %v734 = vld [vmem:[#allocation8 + $0x1c] sm:$0xf]
    %v735 = vld [vmem:[#allocation8 + $0x20] sm:$0xf]
    %v736 = vld [vmem:[#allocation8 + $0x24] sm:$0xf]
    %v737 = vld [vmem:[#allocation8 + $0x28] sm:$0xf]
    %v738 = vld [vmem:[#allocation8 + $0x2c] sm:$0xf]
    %v739 = vld [vmem:[#allocation8 + $0x30] sm:$0xf]
    %v740 = vld [vmem:[#allocation8 + $0x34] sm:$0xf]
    %v741 = vld [vmem:[#allocation8 + $0x38] sm:$0xf]
    %v742 = vld [vmem:[#allocation8 + $0x3c] sm:$0xf]
    %v743 = vld [vmem:[%s6] sm:$0x1]
    %v745 = vlaneseq
    %v746 = vshrl.u32 %v745, 7
    %v747 = vsub.s32 0, %v746
    %v748 = vrot.slane %v743, %v747
    %v766 = vunpack.c.l.b16 %v727
    %v767 = vunpack.c.l.b16 %v728
    %v768 = vunpack.c.l.b16 %v729
    %v769 = vunpack.c.l.b16 %v730
    %v770 = vunpack.c.l.b16 %v731
    %v771 = vunpack.c.l.b16 %v732
    %v772 = vunpack.c.l.b16 %v733
    %v773 = vunpack.c.l.b16 %v734
    %v774 = vunpack.c.l.b16 %v735
    %v775 = vunpack.c.l.b16 %v736
    %v776 = vunpack.c.l.b16 %v737
    %v777 = vunpack.c.l.b16 %v738
    %v778 = vunpack.c.l.b16 %v739
    %v779 = vunpack.c.l.b16 %v740
    %v780 = vunpack.c.l.b16 %v741
    %v781 = vunpack.c.l.b16 %v742
    %v782 = vpack.c.b16 %v767, %v766
    %v783 = vpack.c.b16 %v769, %v768
    %v784 = vpack.c.b16 %v771, %v770
    %v785 = vpack.c.b16 %v773, %v772
    %v786 = vpack.c.b16 %v775, %v774
    %v787 = vpack.c.b16 %v777, %v776
    %v788 = vpack.c.b16 %v779, %v778
    %v789 = vpack.c.b16 %v781, %v780
    %798 = vmatprep.subr.bf16.mxu0 0
    %799 = vmatpush1.bf16.msra.mxu0 %v782
    %800 = vmatprep.subr.bf16.mxu0 0
    %801 = vmatpush1.bf16.msra.mxu0 %v783
    %802 = vmatprep.subr.bf16.mxu0 0
    %803 = vmatpush1.bf16.msra.mxu0 %v784
    %804 = vmatprep.subr.bf16.mxu0 0
    %805 = vmatpush1.bf16.msra.mxu0 %v785
    %806 = vmatprep.subr.bf16.mxu0 0
    %807 = vmatpush1.bf16.msra.mxu0 %v786
    %808 = vmatprep.subr.bf16.mxu0 0
    %809 = vmatpush1.bf16.msra.mxu0 %v787
    %810 = vmatprep.subr.bf16.mxu0 0
    %811 = vmatpush1.bf16.msra.mxu0 %v788
    %812 = vmatprep.subr.bf16.mxu0 0
    %813 = vmatpush1.bf16.msra.mxu0 %v789
    %814 = vmatprep.subr.bf16.mxu0 0
    %815 = vmatpush1.bf16.msra.mxu0 0
    %816 = vmatprep.subr.bf16.mxu0 0
    %817 = vmatpush1.bf16.msra.mxu0 0
    %818 = vmatprep.subr.bf16.mxu0 0
    %819 = vmatpush1.bf16.msra.mxu0 0
    %820 = vmatprep.subr.bf16.mxu0 0
    %821 = vmatpush1.bf16.msra.mxu0 0
    %822 = vmatprep.subr.bf16.mxu0 0
    %823 = vmatpush1.bf16.msra.mxu0 0
    %824 = vmatprep.subr.bf16.mxu0 0
    %825 = vmatpush1.bf16.msra.mxu0 0
    %826 = vmatprep.subr.bf16.mxu0 0
    %827 = vmatpush1.bf16.msra.mxu0 0
    %828 = vmatprep.subr.bf16.mxu0 0
    %829 = vmatpush1.bf16.msra.mxu0 0
    %830 = vmatprep.mubr.bf16.mxu0 0
    %831 = vmatmul.mubr.bf16.gmra.mrb[0].mxu0 %v241
    %v832 = vpop.f32.mrb[0].mxu0
    %v833 = vadd.f32 %v748, %v832
    %v834 = vpop.f32.mrb[0].mxu0
    %v835 = vpop.f32.mrb[0].mxu0
    %v836 = vadd.f32 %v748, %v835
    %v837 = vpop.f32.mrb[0].mxu0
    %838 = vmatprep.mubr.bf16.mxu0 0
    %839 = vmatmul.mubr.bf16.gmra.mrb[0].mxu0 %v242
    %v840 = vpop.f32.mrb[0].mxu0
    %v841 = vadd.f32 %v748, %v840
    %v842 = vpop.f32.mrb[0].mxu0
    %v843 = vpop.f32.mrb[0].mxu0
    %v844 = vadd.f32 %v748, %v843
    %v845 = vpop.f32.mrb[0].mxu0
    %846 = vdwg.mxu0
    %v847 = vadd.f32 %v723, %v833
    %v848 = vadd.f32 %v724, %v836
    %v849 = vadd.f32 %v725, %v841
    %v850 = vadd.f32 %v726, %v844
    %v851 = vmax.f32 %v847, 0.0
    %v852 = vmax.f32 %v848, 0.0
    %v853 = vmax.f32 %v849, 0.0
    %v854 = vmax.f32 %v850, 0.0
    %v855 = vrot.slane %v851, 6
    %v856 = vrot.slane %v852, 6
    %v857 = vrot.slane %v853, 6
    %v858 = vrot.slane %v854, 6
    %vm859 = vcmp.lt.s32.totalorder %v142, 2
    %v860 = vsel %vm859, %v857, %v858
    %v861 = vsel %vm859, %v856, %v857
    %v862 = vsel %vm859, %v855, %v856
    %v863 = vsel %vm859, %v858, %v855
    %vm864 = vcmp.ge.s32.totalorder %v190, 2
    %vm865 = vcmp.ge.s32.totalorder %v191, 2
    %vm866 = vcmp.ge.s32.totalorder %v192, 2
    %vm867 = vcmp.ge.s32.totalorder %v193, 2
    %v868 = vsel %vm864, 1, 0
    %v869 = vsel %vm865, 1, 0
    %v870 = vsel %vm866, 1, 0
    %v871 = vsel %vm867, 1, 0
    %vm872 = vcmp.eq.s32.totalorder %v868, 1
    %vm873 = vcmp.eq.s32.totalorder %v869, 1
    %vm874 = vcmp.eq.s32.totalorder %v870, 1
    %vm875 = vcmp.eq.s32.totalorder %v871, 1
    %v876 = vsel %vm872, %v863, 0.0
    %v877 = vsel %vm873, %v862, 0.0
    %v878 = vsel %vm874, %v861, 0.0
    %v879 = vsel %vm875, %v860, 0.0
    %v880 = vpack.c.bf16 %v877, %v876
    %v881 = vpack.c.bf16 %v879, %v878
    %v882 = vld [vmem:[#allocation10] sm:$0xf]
    %v883 = vld [vmem:[#allocation10 + $0x4] sm:$0xf]
    %v884 = vld [vmem:[#allocation10 + $0x8] sm:$0xf]
    %v885 = vld [vmem:[#allocation10 + $0xc] sm:$0xf]
    %v886 = vld [vmem:[#allocation10 + $0x10] sm:$0xf]
    %v887 = vld [vmem:[#allocation10 + $0x14] sm:$0xf]
    %v888 = vld [vmem:[#allocation10 + $0x18] sm:$0xf]
    %v889 = vld [vmem:[#allocation10 + $0x1c] sm:$0xf]
    %v890 = vld [vmem:[#allocation10 + $0x20] sm:$0xf]
    %v891 = vld [vmem:[#allocation10 + $0x24] sm:$0xf]
    %v892 = vld [vmem:[#allocation10 + $0x28] sm:$0xf]
    %v893 = vld [vmem:[#allocation10 + $0x2c] sm:$0xf]
    %v894 = vld [vmem:[#allocation10 + $0x30] sm:$0xf]
    %v895 = vld [vmem:[#allocation10 + $0x34] sm:$0xf]
    %v896 = vld [vmem:[#allocation10 + $0x38] sm:$0xf]
    %v897 = vld [vmem:[#allocation10 + $0x3c] sm:$0xf]
    %v898 = vpack.c.bf16 %v852, %v851
    %v899 = vpack.c.bf16 %v854, %v853
    %s900 = scalar_lea.vmem [#allocation10], 64
    %v901 = vld [vmem:[%s900] sm:$0xf]
    %v902 = vld [vmem:[%s900 + $0x4] sm:$0xf]
    %v903 = vld [vmem:[%s900 + $0x8] sm:$0xf]
    %v904 = vld [vmem:[%s900 + $0xc] sm:$0xf]
    %v905 = vld [vmem:[%s900 + $0x10] sm:$0xf]
    %v906 = vld [vmem:[%s900 + $0x14] sm:$0xf]
    %v907 = vld [vmem:[%s900 + $0x18] sm:$0xf]
    %v908 = vld [vmem:[%s900 + $0x1c] sm:$0xf]
    %v909 = vld [vmem:[%s900 + $0x20] sm:$0xf]
    %v910 = vld [vmem:[%s900 + $0x24] sm:$0xf]
    %v911 = vld [vmem:[%s900 + $0x28] sm:$0xf]
    %v912 = vld [vmem:[%s900 + $0x2c] sm:$0xf]
    %v913 = vld [vmem:[%s900 + $0x30] sm:$0xf]
    %v914 = vld [vmem:[%s900 + $0x34] sm:$0xf]
    %v915 = vld [vmem:[%s900 + $0x38] sm:$0xf]
    %v916 = vld [vmem:[%s900 + $0x3c] sm:$0xf]
    %v933 = vunpack.c.l.b16 %v901
    %v934 = vunpack.c.l.b16 %v902
    %v935 = vunpack.c.l.b16 %v903
    %v936 = vunpack.c.l.b16 %v904
    %v937 = vunpack.c.l.b16 %v905
    %v938 = vunpack.c.l.b16 %v906
    %v939 = vunpack.c.l.b16 %v907
    %v940 = vunpack.c.l.b16 %v908
    %v941 = vunpack.c.l.b16 %v909
    %v942 = vunpack.c.l.b16 %v910
    %v943 = vunpack.c.l.b16 %v911
    %v944 = vunpack.c.l.b16 %v912
    %v945 = vunpack.c.l.b16 %v913
    %v946 = vunpack.c.l.b16 %v914
    %v947 = vunpack.c.l.b16 %v915
    %v948 = vunpack.c.l.b16 %v916
    %v949 = vpack.c.b16 %v934, %v933
    %v950 = vpack.c.b16 %v936, %v935
    %v951 = vpack.c.b16 %v938, %v937
    %v952 = vpack.c.b16 %v940, %v939
    %v953 = vpack.c.b16 %v942, %v941
    %v954 = vpack.c.b16 %v944, %v943
    %v955 = vpack.c.b16 %v946, %v945
    %v956 = vpack.c.b16 %v948, %v947
    %965 = vmatprep.subr.bf16.mxu0 0
    %966 = vmatpush1.bf16.msra.mxu0 %v949
    %967 = vmatprep.subr.bf16.mxu0 0
    %968 = vmatpush1.bf16.msra.mxu0 %v950
    %969 = vmatprep.subr.bf16.mxu0 0
    %970 = vmatpush1.bf16.msra.mxu0 %v951
    %971 = vmatprep.subr.bf16.mxu0 0
    %972 = vmatpush1.bf16.msra.mxu0 %v952
    %973 = vmatprep.subr.bf16.mxu0 0
    %974 = vmatpush1.bf16.msra.mxu0 %v953
    %975 = vmatprep.subr.bf16.mxu0 0
    %976 = vmatpush1.bf16.msra.mxu0 %v954
    %977 = vmatprep.subr.bf16.mxu0 0
    %978 = vmatpush1.bf16.msra.mxu0 %v955
    %979 = vmatprep.subr.bf16.mxu0 0
    %980 = vmatpush1.bf16.msra.mxu0 %v956
    %981 = vmatprep.subr.bf16.mxu0 0
    %982 = vmatpush1.bf16.msra.mxu0 0
    %983 = vmatprep.subr.bf16.mxu0 0
    %984 = vmatpush1.bf16.msra.mxu0 0
    %985 = vmatprep.subr.bf16.mxu0 0
    %986 = vmatpush1.bf16.msra.mxu0 0
    %987 = vmatprep.subr.bf16.mxu0 0
    %988 = vmatpush1.bf16.msra.mxu0 0
    %989 = vmatprep.subr.bf16.mxu0 0
    %990 = vmatpush1.bf16.msra.mxu0 0
    %991 = vmatprep.subr.bf16.mxu0 0
    %992 = vmatpush1.bf16.msra.mxu0 0
    %993 = vmatprep.subr.bf16.mxu0 0
    %994 = vmatpush1.bf16.msra.mxu0 0
    %995 = vmatprep.subr.bf16.mxu0 0
    %996 = vmatpush1.bf16.msra.mxu0 0
    %997 = vmatprep.mubr.bf16.mxu0 0
    %998 = vmatmul.mubr.bf16.gmra.mrb[0].mxu0 %v898
    %v999 = vpop.f32.mrb[0].mxu0
    %v1000 = vadd.f32 0.0, %v999
    %v1001 = vpop.f32.mrb[0].mxu0
    %v1002 = vpop.f32.mrb[0].mxu0
    %v1003 = vadd.f32 0.0, %v1002
    %v1004 = vpop.f32.mrb[0].mxu0
    %1005 = vmatprep.mubr.bf16.mxu0 0
    %1006 = vmatmul.mubr.bf16.gmra.mrb[0].mxu0 %v899
    %v1007 = vpop.f32.mrb[0].mxu0
    %v1008 = vadd.f32 0.0, %v1007
    %v1009 = vpop.f32.mrb[0].mxu0
    %v1010 = vpop.f32.mrb[0].mxu0
    %v1011 = vadd.f32 0.0, %v1010
    %v1012 = vpop.f32.mrb[0].mxu0
    %1013 = vdwg.mxu0
    %v1030 = vunpack.c.l.b16 %v882
    %v1031 = vunpack.c.l.b16 %v883
    %v1032 = vunpack.c.l.b16 %v884
    %v1033 = vunpack.c.l.b16 %v885
    %v1034 = vunpack.c.l.b16 %v886
    %v1035 = vunpack.c.l.b16 %v887
    %v1036 = vunpack.c.l.b16 %v888
    %v1037 = vunpack.c.l.b16 %v889
    %v1038 = vunpack.c.l.b16 %v890
    %v1039 = vunpack.c.l.b16 %v891
    %v1040 = vunpack.c.l.b16 %v892
    %v1041 = vunpack.c.l.b16 %v893
    %v1042 = vunpack.c.l.b16 %v894
    %v1043 = vunpack.c.l.b16 %v895
    %v1044 = vunpack.c.l.b16 %v896
    %v1045 = vunpack.c.l.b16 %v897
    %v1046 = vpack.c.b16 %v1031, %v1030
    %v1047 = vpack.c.b16 %v1033, %v1032
    %v1048 = vpack.c.b16 %v1035, %v1034
    %v1049 = vpack.c.b16 %v1037, %v1036
    %v1050 = vpack.c.b16 %v1039, %v1038
    %v1051 = vpack.c.b16 %v1041, %v1040
    %v1052 = vpack.c.b16 %v1043, %v1042
    %v1053 = vpack.c.b16 %v1045, %v1044
    %1062 = vmatprep.subr.bf16.mxu0 0
    %1063 = vmatpush1.bf16.msra.mxu0 %v1046
    %1064 = vmatprep.subr.bf16.mxu0 0
    %1065 = vmatpush1.bf16.msra.mxu0 %v1047
    %1066 = vmatprep.subr.bf16.mxu0 0
    %1067 = vmatpush1.bf16.msra.mxu0 %v1048
    %1068 = vmatprep.subr.bf16.mxu0 0
    %1069 = vmatpush1.bf16.msra.mxu0 %v1049
    %1070 = vmatprep.subr.bf16.mxu0 0
    %1071 = vmatpush1.bf16.msra.mxu0 %v1050
    %1072 = vmatprep.subr.bf16.mxu0 0
    %1073 = vmatpush1.bf16.msra.mxu0 %v1051
    %1074 = vmatprep.subr.bf16.mxu0 0
    %1075 = vmatpush1.bf16.msra.mxu0 %v1052
    %1076 = vmatprep.subr.bf16.mxu0 0
    %1077 = vmatpush1.bf16.msra.mxu0 %v1053
    %1078 = vmatprep.subr.bf16.mxu0 0
    %1079 = vmatpush1.bf16.msra.mxu0 0
    %1080 = vmatprep.subr.bf16.mxu0 0
    %1081 = vmatpush1.bf16.msra.mxu0 0
    %1082 = vmatprep.subr.bf16.mxu0 0
    %1083 = vmatpush1.bf16.msra.mxu0 0
    %1084 = vmatprep.subr.bf16.mxu0 0
    %1085 = vmatpush1.bf16.msra.mxu0 0
    %1086 = vmatprep.subr.bf16.mxu0 0
    %1087 = vmatpush1.bf16.msra.mxu0 0
    %1088 = vmatprep.subr.bf16.mxu0 0
    %1089 = vmatpush1.bf16.msra.mxu0 0
    %1090 = vmatprep.subr.bf16.mxu0 0
    %1091 = vmatpush1.bf16.msra.mxu0 0
    %1092 = vmatprep.subr.bf16.mxu0 0
    %1093 = vmatpush1.bf16.msra.mxu0 0
    %1094 = vmatprep.mubr.bf16.mxu0 0
    %1095 = vmatmul.mubr.bf16.gmra.mrb[0].mxu0 %v880
    %v1096 = vpop.f32.mrb[0].mxu0
    %v1097 = vadd.f32 %v1000, %v1096
    %v1098 = vpop.f32.mrb[0].mxu0
    %v1099 = vpop.f32.mrb[0].mxu0
    %v1100 = vadd.f32 %v1003, %v1099
    %v1101 = vpop.f32.mrb[0].mxu0
    %1102 = vmatprep.mubr.bf16.mxu0 0
    %1103 = vmatmul.mubr.bf16.gmra.mrb[0].mxu0 %v881
    %v1104 = vpop.f32.mrb[0].mxu0
    %v1105 = vadd.f32 %v1008, %v1104
    %v1106 = vpop.f32.mrb[0].mxu0
    %v1107 = vpop.f32.mrb[0].mxu0
    %v1108 = vadd.f32 %v1011, %v1107
    %v1109 = vpop.f32.mrb[0].mxu0
    %1110 = vdwg.mxu0
    %v1111 = vld [vmem:[%s8] sm:$0x1]
    %v1113 = vlaneseq
    %v1114 = vshrl.u32 %v1113, 7
    %v1115 = vsub.s32 0, %v1114
    %v1116 = vrot.slane %v1111, %v1115
    %v1118 = vadd.f32 %v1097, %v1116
    %v1119 = vadd.f32 %v1100, %v1116
    %v1120 = vadd.f32 %v1105, %v1116
    %v1121 = vadd.f32 %v1108, %v1116
    %v1122 = vmax.f32 %v1118, 0.0
    %v1123 = vmax.f32 %v1119, 0.0
    %v1124 = vmax.f32 %v1120, 0.0
    %v1125 = vmax.f32 %v1121, 0.0
    %v1126 = vrot.slane %v1122, 6
    %v1127 = vrot.slane %v1123, 6
    %v1128 = vrot.slane %v1124, 6
    %v1129 = vrot.slane %v1125, 6
    %v1130 = vsel %vm859, %v1128, %v1129
    %v1131 = vsel %vm859, %v1127, %v1128
    %v1132 = vsel %vm859, %v1126, %v1127
    %v1133 = vsel %vm859, %v1129, %v1126
    %v1134 = vsel %vm872, %v1133, 0.0
    %v1135 = vsel %vm873, %v1132, 0.0
    %v1136 = vsel %vm874, %v1131, 0.0
    %v1137 = vsel %vm875, %v1130, 0.0
    %v1138 = vpack.c.bf16 %v1135, %v1134
    %v1139 = vpack.c.bf16 %v1137, %v1136
    %v1140 = vld [vmem:[#allocation11] sm:$0xf]
    %v1141 = vld [vmem:[#allocation11 + $0x4] sm:$0xf]
    %v1142 = vld [vmem:[#allocation11 + $0x8] sm:$0xf]
    %v1143 = vld [vmem:[#allocation11 + $0xc] sm:$0xf]
    %v1144 = vld [vmem:[#allocation11 + $0x10] sm:$0xf]
    %v1145 = vld [vmem:[#allocation11 + $0x14] sm:$0xf]
    %v1146 = vld [vmem:[#allocation11 + $0x18] sm:$0xf]
    %v1147 = vld [vmem:[#allocation11 + $0x1c] sm:$0xf]
    %v1148 = vld [vmem:[#allocation11 + $0x20] sm:$0xf]
    %v1149 = vld [vmem:[#allocation11 + $0x24] sm:$0xf]
    %v1150 = vld [vmem:[#allocation11 + $0x28] sm:$0xf]
    %v1151 = vld [vmem:[#allocation11 + $0x2c] sm:$0xf]
    %v1152 = vld [vmem:[#allocation11 + $0x30] sm:$0xf]
    %v1153 = vld [vmem:[#allocation11 + $0x34] sm:$0xf]
    %v1154 = vld [vmem:[#allocation11 + $0x38] sm:$0xf]
    %v1155 = vld [vmem:[#allocation11 + $0x3c] sm:$0xf]
    %v1156 = vpack.c.bf16 %v1123, %v1122
    %v1157 = vpack.c.bf16 %v1125, %v1124
    %s1158 = scalar_lea.vmem [#allocation11], 64
    %v1159 = vld [vmem:[%s1158] sm:$0xf]
    %v1160 = vld [vmem:[%s1158 + $0x4] sm:$0xf]
    %v1161 = vld [vmem:[%s1158 + $0x8] sm:$0xf]
    %v1162 = vld [vmem:[%s1158 + $0xc] sm:$0xf]
    %v1163 = vld [vmem:[%s1158 + $0x10] sm:$0xf]
    %v1164 = vld [vmem:[%s1158 + $0x14] sm:$0xf]
    %v1165 = vld [vmem:[%s1158 + $0x18] sm:$0xf]
    %v1166 = vld [vmem:[%s1158 + $0x1c] sm:$0xf]
    %v1167 = vld [vmem:[%s1158 + $0x20] sm:$0xf]
    %v1168 = vld [vmem:[%s1158 + $0x24] sm:$0xf]
    %v1169 = vld [vmem:[%s1158 + $0x28] sm:$0xf]
    %v1170 = vld [vmem:[%s1158 + $0x2c] sm:$0xf]
    %v1171 = vld [vmem:[%s1158 + $0x30] sm:$0xf]
    %v1172 = vld [vmem:[%s1158 + $0x34] sm:$0xf]
    %v1173 = vld [vmem:[%s1158 + $0x38] sm:$0xf]
    %v1174 = vld [vmem:[%s1158 + $0x3c] sm:$0xf]
    %v1191 = vunpack.c.l.b16 %v1159
    %v1192 = vunpack.c.l.b16 %v1160
    %v1193 = vunpack.c.l.b16 %v1161
    %v1194 = vunpack.c.l.b16 %v1162
    %v1195 = vunpack.c.l.b16 %v1163
    %v1196 = vunpack.c.l.b16 %v1164
    %v1197 = vunpack.c.l.b16 %v1165
    %v1198 = vunpack.c.l.b16 %v1166
    %v1199 = vunpack.c.l.b16 %v1167
    %v1200 = vunpack.c.l.b16 %v1168
    %v1201 = vunpack.c.l.b16 %v1169
    %v1202 = vunpack.c.l.b16 %v1170
    %v1203 = vunpack.c.l.b16 %v1171
    %v1204 = vunpack.c.l.b16 %v1172
    %v1205 = vunpack.c.l.b16 %v1173
    %v1206 = vunpack.c.l.b16 %v1174
    %v1207 = vpack.c.b16 %v1192, %v1191
    %v1208 = vpack.c.b16 %v1194, %v1193
    %v1209 = vpack.c.b16 %v1196, %v1195
    %v1210 = vpack.c.b16 %v1198, %v1197
    %v1211 = vpack.c.b16 %v1200, %v1199
    %v1212 = vpack.c.b16 %v1202, %v1201
    %v1213 = vpack.c.b16 %v1204, %v1203
    %v1214 = vpack.c.b16 %v1206, %v1205
    %1223 = vmatprep.subr.bf16.mxu0 0
    %1224 = vmatpush1.bf16.msra.mxu0 %v1207
    %1225 = vmatprep.subr.bf16.mxu0 0
    %1226 = vmatpush1.bf16.msra.mxu0 %v1208
    %1227 = vmatprep.subr.bf16.mxu0 0
    %1228 = vmatpush1.bf16.msra.mxu0 %v1209
    %1229 = vmatprep.subr.bf16.mxu0 0
    %1230 = vmatpush1.bf16.msra.mxu0 %v1210
    %1231 = vmatprep.subr.bf16.mxu0 0
    %1232 = vmatpush1.bf16.msra.mxu0 %v1211
    %1233 = vmatprep.subr.bf16.mxu0 0
    %1234 = vmatpush1.bf16.msra.mxu0 %v1212
    %1235 = vmatprep.subr.bf16.mxu0 0
    %1236 = vmatpush1.bf16.msra.mxu0 %v1213
    %1237 = vmatprep.subr.bf16.mxu0 0
    %1238 = vmatpush1.bf16.msra.mxu0 %v1214
    %1239 = vmatprep.subr.bf16.mxu0 0
    %1240 = vmatpush1.bf16.msra.mxu0 0
    %1241 = vmatprep.subr.bf16.mxu0 0
    %1242 = vmatpush1.bf16.msra.mxu0 0
    %1243 = vmatprep.subr.bf16.mxu0 0
    %1244 = vmatpush1.bf16.msra.mxu0 0
    %1245 = vmatprep.subr.bf16.mxu0 0
    %1246 = vmatpush1.bf16.msra.mxu0 0
    %1247 = vmatprep.subr.bf16.mxu0 0
    %1248 = vmatpush1.bf16.msra.mxu0 0
    %1249 = vmatprep.subr.bf16.mxu0 0
    %1250 = vmatpush1.bf16.msra.mxu0 0
    %1251 = vmatprep.subr.bf16.mxu0 0
    %1252 = vmatpush1.bf16.msra.mxu0 0
    %1253 = vmatprep.subr.bf16.mxu0 0
    %1254 = vmatpush1.bf16.msra.mxu0 0
    %1255 = vmatprep.mubr.bf16.mxu0 0
    %1256 = vmatmul.mubr.bf16.gmra.mrb[0].mxu0 %v1156
    %v1257 = vpop.f32.mrb[0].mxu0
    %v1258 = vadd.f32 0.0, %v1257
    %v1259 = vpop.f32.mrb[0].mxu0
    %v1260 = vpop.f32.mrb[0].mxu0
    %v1261 = vadd.f32 0.0, %v1260
    %v1262 = vpop.f32.mrb[0].mxu0
    %1263 = vmatprep.mubr.bf16.mxu0 0
    %1264 = vmatmul.mubr.bf16.gmra.mrb[0].mxu0 %v1157
    %v1265 = vpop.f32.mrb[0].mxu0
    %v1266 = vadd.f32 0.0, %v1265
    %v1267 = vpop.f32.mrb[0].mxu0
    %v1268 = vpop.f32.mrb[0].mxu0
    %v1269 = vadd.f32 0.0, %v1268
    %v1270 = vpop.f32.mrb[0].mxu0
    %1271 = vdwg.mxu0
    %v1288 = vunpack.c.l.b16 %v1140
    %v1289 = vunpack.c.l.b16 %v1141
    %v1290 = vunpack.c.l.b16 %v1142
    %v1291 = vunpack.c.l.b16 %v1143
    %v1292 = vunpack.c.l.b16 %v1144
    %v1293 = vunpack.c.l.b16 %v1145
    %v1294 = vunpack.c.l.b16 %v1146
    %v1295 = vunpack.c.l.b16 %v1147
    %v1296 = vunpack.c.l.b16 %v1148
    %v1297 = vunpack.c.l.b16 %v1149
    %v1298 = vunpack.c.l.b16 %v1150
    %v1299 = vunpack.c.l.b16 %v1151
    %v1300 = vunpack.c.l.b16 %v1152
    %v1301 = vunpack.c.l.b16 %v1153
    %v1302 = vunpack.c.l.b16 %v1154
    %v1303 = vunpack.c.l.b16 %v1155
    %v1304 = vpack.c.b16 %v1289, %v1288
    %v1305 = vpack.c.b16 %v1291, %v1290
    %v1306 = vpack.c.b16 %v1293, %v1292
    %v1307 = vpack.c.b16 %v1295, %v1294
    %v1308 = vpack.c.b16 %v1297, %v1296
    %v1309 = vpack.c.b16 %v1299, %v1298
    %v1310 = vpack.c.b16 %v1301, %v1300
    %v1311 = vpack.c.b16 %v1303, %v1302
    %1320 = vmatprep.subr.bf16.mxu0 0
    %1321 = vmatpush1.bf16.msra.mxu0 %v1304
    %1322 = vmatprep.subr.bf16.mxu0 0
    %1323 = vmatpush1.bf16.msra.mxu0 %v1305
    %1324 = vmatprep.subr.bf16.mxu0 0
    %1325 = vmatpush1.bf16.msra.mxu0 %v1306
    %1326 = vmatprep.subr.bf16.mxu0 0
    %1327 = vmatpush1.bf16.msra.mxu0 %v1307
    %1328 = vmatprep.subr.bf16.mxu0 0
    %1329 = vmatpush1.bf16.msra.mxu0 %v1308
    %1330 = vmatprep.subr.bf16.mxu0 0
    %1331 = vmatpush1.bf16.msra.mxu0 %v1309
    %1332 = vmatprep.subr.bf16.mxu0 0
    %1333 = vmatpush1.bf16.msra.mxu0 %v1310
    %1334 = vmatprep.subr.bf16.mxu0 0
    %1335 = vmatpush1.bf16.msra.mxu0 %v1311
    %1336 = vmatprep.subr.bf16.mxu0 0
    %1337 = vmatpush1.bf16.msra.mxu0 0
    %1338 = vmatprep.subr.bf16.mxu0 0
    %1339 = vmatpush1.bf16.msra.mxu0 0
    %1340 = vmatprep.subr.bf16.mxu0 0
    %1341 = vmatpush1.bf16.msra.mxu0 0
    %1342 = vmatprep.subr.bf16.mxu0 0
    %1343 = vmatpush1.bf16.msra.mxu0 0
    %1344 = vmatprep.subr.bf16.mxu0 0
    %1345 = vmatpush1.bf16.msra.mxu0 0
    %1346 = vmatprep.subr.bf16.mxu0 0
    %1347 = vmatpush1.bf16.msra.mxu0 0
    %1348 = vmatprep.subr.bf16.mxu0 0
    %1349 = vmatpush1.bf16.msra.mxu0 0
    %1350 = vmatprep.subr.bf16.mxu0 0
    %1351 = vmatpush1.bf16.msra.mxu0 0
    %1352 = vmatprep.mubr.bf16.mxu0 0
    %1353 = vmatmul.mubr.bf16.gmra.mrb[0].mxu0 %v1138
    %v1354 = vpop.f32.mrb[0].mxu0
    %v1355 = vadd.f32 %v1258, %v1354
    %v1356 = vpop.f32.mrb[0].mxu0
    %v1357 = vpop.f32.mrb[0].mxu0
    %v1358 = vadd.f32 %v1261, %v1357
    %v1359 = vpop.f32.mrb[0].mxu0
    %1360 = vmatprep.mubr.bf16.mxu0 0
    %1361 = vmatmul.mubr.bf16.gmra.mrb[0].mxu0 %v1139
    %v1362 = vpop.f32.mrb[0].mxu0
    %v1363 = vadd.f32 %v1266, %v1362
    %v1364 = vpop.f32.mrb[0].mxu0
    %v1365 = vpop.f32.mrb[0].mxu0
    %v1366 = vadd.f32 %v1269, %v1365
    %v1367 = vpop.f32.mrb[0].mxu0
    %1368 = vdwg.mxu0
    %v1369 = vld [vmem:[%s10] sm:$0x1]
    %v1371 = vlaneseq
    %v1372 = vshrl.u32 %v1371, 7
    %v1373 = vsub.s32 0, %v1372
    %v1374 = vrot.slane %v1369, %v1373
    %v1376 = vadd.f32 %v1355, %v1374
    %v1377 = vadd.f32 %v1358, %v1374
    %v1378 = vadd.f32 %v1363, %v1374
    %v1379 = vadd.f32 %v1366, %v1374
    %v1380 = vmax.f32 %v1376, 0.0
    %v1381 = vmax.f32 %v1377, 0.0
    %v1382 = vmax.f32 %v1378, 0.0
    %v1383 = vmax.f32 %v1379, 0.0
    %v1384 = vadd.f32 %v1380, %v851
    %v1385 = vadd.f32 %v1381, %v852
    %v1386 = vadd.f32 %v1382, %v853
    %v1387 = vadd.f32 %v1383, %v854
    %v1388 = vmax.f32 %v1384, 0.0
    %v1389 = vmax.f32 %v1385, 0.0
    %v1390 = vmax.f32 %v1386, 0.0
    %v1391 = vmax.f32 %v1387, 0.0
    %v1392 = vpack.c.bf16 %v1389, %v1388
    %v1393 = vpack.c.bf16 %v1391, %v1390
    %v1394 = vld [vmem:[#allocation13] sm:$0xf]
    %v1395 = vld [vmem:[#allocation13 + $0x4] sm:$0xf]
    %v1396 = vld [vmem:[#allocation13 + $0x8] sm:$0xf]
    %v1397 = vld [vmem:[#allocation13 + $0xc] sm:$0xf]
    %v1398 = vld [vmem:[#allocation13 + $0x10] sm:$0xf]
    %v1399 = vld [vmem:[#allocation13 + $0x14] sm:$0xf]
    %v1400 = vld [vmem:[#allocation13 + $0x18] sm:$0xf]
    %v1401 = vld [vmem:[#allocation13 + $0x1c] sm:$0xf]
    %v1402 = vld [vmem:[#allocation13 + $0x20] sm:$0xf]
    %v1403 = vld [vmem:[#allocation13 + $0x24] sm:$0xf]
    %v1404 = vld [vmem:[#allocation13 + $0x28] sm:$0xf]
    %v1405 = vld [vmem:[#allocation13 + $0x2c] sm:$0xf]
    %v1406 = vld [vmem:[#allocation13 + $0x30] sm:$0xf]
    %v1407 = vld [vmem:[#allocation13 + $0x34] sm:$0xf]
    %v1408 = vld [vmem:[#allocation13 + $0x38] sm:$0xf]
    %v1409 = vld [vmem:[#allocation13 + $0x3c] sm:$0xf]
    %v1410 = vld [vmem:[%s12] sm:$0x1]
    %v1412 = vlaneseq
    %v1413 = vshrl.u32 %v1412, 7
    %v1414 = vsub.s32 0, %v1413
    %v1415 = vrot.slane %v1410, %v1414
    %v1433 = vunpack.c.l.b16 %v1394
    %v1434 = vunpack.c.l.b16 %v1395
    %v1435 = vunpack.c.l.b16 %v1396
    %v1436 = vunpack.c.l.b16 %v1397
    %v1437 = vunpack.c.l.b16 %v1398
    %v1438 = vunpack.c.l.b16 %v1399
    %v1439 = vunpack.c.l.b16 %v1400
    %v1440 = vunpack.c.l.b16 %v1401
    %v1441 = vunpack.c.l.b16 %v1402
    %v1442 = vunpack.c.l.b16 %v1403
    %v1443 = vunpack.c.l.b16 %v1404
    %v1444 = vunpack.c.l.b16 %v1405
    %v1445 = vunpack.c.l.b16 %v1406
    %v1446 = vunpack.c.l.b16 %v1407
    %v1447 = vunpack.c.l.b16 %v1408
    %v1448 = vunpack.c.l.b16 %v1409
    %v1449 = vpack.c.b16 %v1434, %v1433
    %v1450 = vpack.c.b16 %v1436, %v1435
    %v1451 = vpack.c.b16 %v1438, %v1437
    %v1452 = vpack.c.b16 %v1440, %v1439
    %v1453 = vpack.c.b16 %v1442, %v1441
    %v1454 = vpack.c.b16 %v1444, %v1443
    %v1455 = vpack.c.b16 %v1446, %v1445
    %v1456 = vpack.c.b16 %v1448, %v1447
    %1465 = vmatprep.subr.bf16.mxu0 0
    %1466 = vmatpush1.bf16.msra.mxu0 %v1449
    %1467 = vmatprep.subr.bf16.mxu0 0
    %1468 = vmatpush1.bf16.msra.mxu0 %v1450
    %1469 = vmatprep.subr.bf16.mxu0 0
    %1470 = vmatpush1.bf16.msra.mxu0 %v1451
    %1471 = vmatprep.subr.bf16.mxu0 0
    %1472 = vmatpush1.bf16.msra.mxu0 %v1452
    %1473 = vmatprep.subr.bf16.mxu0 0
    %1474 = vmatpush1.bf16.msra.mxu0 %v1453
    %1475 = vmatprep.subr.bf16.mxu0 0
    %1476 = vmatpush1.bf16.msra.mxu0 %v1454
    %1477 = vmatprep.subr.bf16.mxu0 0
    %1478 = vmatpush1.bf16.msra.mxu0 %v1455
    %1479 = vmatprep.subr.bf16.mxu0 0
    %1480 = vmatpush1.bf16.msra.mxu0 %v1456
    %1481 = vmatprep.subr.bf16.mxu0 0
    %1482 = vmatpush1.bf16.msra.mxu0 0
    %1483 = vmatprep.subr.bf16.mxu0 0
    %1484 = vmatpush1.bf16.msra.mxu0 0
    %1485 = vmatprep.subr.bf16.mxu0 0
    %1486 = vmatpush1.bf16.msra.mxu0 0
    %1487 = vmatprep.subr.bf16.mxu0 0
    %1488 = vmatpush1.bf16.msra.mxu0 0
    %1489 = vmatprep.subr.bf16.mxu0 0
    %1490 = vmatpush1.bf16.msra.mxu0 0
    %1491 = vmatprep.subr.bf16.mxu0 0
    %1492 = vmatpush1.bf16.msra.mxu0 0
    %1493 = vmatprep.subr.bf16.mxu0 0
    %1494 = vmatpush1.bf16.msra.mxu0 0
    %1495 = vmatprep.subr.bf16.mxu0 0
    %1496 = vmatpush1.bf16.msra.mxu0 0
    %1497 = vmatprep.mubr.bf16.mxu0 0
    %1498 = vmatmul.mubr.bf16.gmra.mrb[0].mxu0 %v1392
    %v1499 = vpop.f32.mrb[0].mxu0
    %v1500 = vadd.f32 %v1415, %v1499
    %v1501 = vpop.f32.mrb[0].mxu0
    %v1502 = vpop.f32.mrb[0].mxu0
    %v1503 = vadd.f32 %v1415, %v1502
    %v1504 = vpop.f32.mrb[0].mxu0
    %1505 = vmatprep.mubr.bf16.mxu0 0
    %1506 = vmatmul.mubr.bf16.gmra.mrb[0].mxu0 %v1393
    %v1507 = vpop.f32.mrb[0].mxu0
    %v1508 = vadd.f32 %v1415, %v1507
    %v1509 = vpop.f32.mrb[0].mxu0
    %v1510 = vpop.f32.mrb[0].mxu0
    %v1511 = vadd.f32 %v1415, %v1510
    %v1512 = vpop.f32.mrb[0].mxu0
    %1513 = vdwg.mxu0
    %1514 = vst [vmem:[#allocation14] sm:$0xff] %v1500
    %1515 = vst [vmem:[#allocation14 + $0x8] sm:$0xff] %v1503
    %1516 = vst [vmem:[#allocation14 + $0x10] sm:$0xff] %v1508
    %1517 = vst [vmem:[#allocation14 + $0x18] sm:$0xff] %v1511
    // Predicated region
    $region82: #{tpu_custom_call.1} parent=1 // pred_check
      _
    $region83: #{tpu_custom_call.1} parent=1 // pred_check_branch
      %1519 = sbr.rel (0) target = $region85
    $region84: #{tpu_custom_call.1} parent=1 // pred_region
      %s1521 = ssub.s32 512, 512
      %1522 = vsyncadd [#allocation4], %s1521
      %s1523 = sshll.u32 [#allocation14], 4
      %s1524 = int_to_ptr.vmem [resolvable:$true] %s1523
      %1529 = dma.vmem_to_hbm [thread:$0]  %s1524, 512, %s13, [#allocation4], 128, 128, 8
    $region85: #{tpu_custom_call.1} parent=1 // pred_fallthru
      _
    // Predicated region
    $region86: #{tpu_custom_call.1} parent=1 // pred_check
      _
    $region87: #{tpu_custom_call.1} parent=1 // pred_check_branch
      %1531 = sbr.rel (0) target = $region89
    $region88: #{tpu_custom_call.1} parent=1 // pred_region
      %1532 = dma.done [#allocation4], 512
    $region89: #{tpu_custom_call.1} parent=1 // pred_fallthru
      _
    %1533 = vsyncpa [#allocation3], 1
    %1534 = vsyncpa [#allocation6], 1
    %1535 = vsyncpa [#allocation9], 1
    %1536 = vsyncpa [#allocation12], 1
    %1537 = vsyncpa [#allocation4], 1

</llo_original>
